<compile_context>
chip_gen: v7x
topology: tpu7x:2x2x1
jax: 0.10.0
libtpu: 0.0.40
codegen_flags: <defaults>
</compile_context>

<pallas_src>
import functools

import jax
import jax.numpy as jnp
from jax import lax
from jax.experimental import pallas as pl
from jax.experimental.pallas import tpu as pltpu


# ---------------------------------------------------------------------------
# Pallas kernel
# ---------------------------------------------------------------------------
def cnn_kernel(tok_ref, mask_ref, w_ref, b_ref, out_ref, *,
               batch, seq_len, embed_dim, vocab_pad, pool_rows):
    E = embed_dim
    N = batch * seq_len
    cdt = w_ref.dtype                       # MXU operand dtype (f32 or bf16)
    f32 = jnp.float32

    bias = b_ref[...]                       # (4, HPAD) tiny, load once

    # ---- example-boundary masks (hoisted (N,1)->(N,C) broadcasts, reused) ----
    m = mask_ref[...]                       # (N, 2)
    mp1 = m[:, 0:1]                         # 0.0 at the first row of each example
    mn1 = m[:, 1:2]                         # 0.0 at the last  row of each example
    mp_e = jnp.broadcast_to(mp1, (N, E))
    mn_e = jnp.broadcast_to(mn1, (N, E))
    mp_2e = jnp.broadcast_to(mp1, (N, 2 * E))
    mn_2e = jnp.broadcast_to(mn1, (N, 2 * E))

    # ---- fused embedding gather: one-hot (N,VPAD) @ table (VPAD,E) on the MXU ----
    onehot = (lax.broadcasted_iota(jnp.int32, (N, vocab_pad), 1)
              == tok_ref[...]).astype(cdt)
    x = jnp.dot(onehot, w_ref[0:vocab_pad, 0:E], preferred_element_type=f32)

    # ---- Conv1d(k=3,pad=1) + eval-BN + ReLU as 3 accumulating per-tap dots ----
    def conv_bn_relu(h, row0, cin, cout, mp, mn, brow):
        hp = pltpu.roll(h, shift=1, axis=0) * mp        # x[t-1], zero across examples
        hn = pltpu.roll(h, shift=N - 1, axis=0) * mn    # x[t+1], zero across examples
        y = (jnp.dot(hp.astype(cdt), w_ref[row0:row0 + cin, 0:cout],
                     preferred_element_type=f32)
             + jnp.dot(h.astype(cdt), w_ref[row0 + cin:row0 + 2 * cin, 0:cout],
                       preferred_element_type=f32)
             + jnp.dot(hn.astype(cdt), w_ref[row0 + 2 * cin:row0 + 3 * cin, 0:cout],
                       preferred_element_type=f32)
             + bias[brow:brow + 1, 0:cout])
        return jnp.maximum(y, 0.0)

    r1 = vocab_pad                  # conv1 weights (3 taps of (E, E))
    r2 = r1 + 3 * E                 # conv2 weights (3 taps of (E, 2E))
    r3 = r2 + 3 * E                 # conv3 weights (3 taps of (2E, E))
    rh = r3 + 6 * E                 # fused head weights (E, HPAD)
    h1 = conv_bn_relu(x, r1, E, E, mp_e, mn_e, 0)            # (N, E)
    h2 = conv_bn_relu(h1, r2, E, 2 * E, mp_e, mn_e, 1)       # (N, 2E)
    h3 = conv_bn_relu(h2, r3, 2 * E, E, mp_2e, mn_2e, 2)     # (N, E)

    # ---- AdaptiveMaxPool1d(1): vectorized per-example max over L ----
    pooled = jnp.max(h3.reshape(batch, seq_len, E), axis=1)  # (B, E)

    # ---- fused heads: [pooled_pad ; h3] @ wh -> one lane-dense 128-wide store ----
    parts = [pooled]
    if pool_rows > batch:
        parts.append(jnp.zeros((pool_rows - batch, E), f32))
    parts.append(h3)
    head_in = jnp.concatenate(parts, axis=0)                 # (R, E), 8-aligned concat

    out_ref[...] = (jnp.dot(head_in.astype(cdt), w_ref[rh:rh + E, :],
                            preferred_element_type=f32)
                    + bias[3:4, :])


# ---------------------------------------------------------------------------
# Parameter init (deterministic, PyTorch-layout), BN folding, packing, wrapper
# ---------------------------------------------------------------------------
def init_params(key, vocab_size, E, n_intent, n_slot, max_intents):
    ks = list(jax.random.split(key, 32))
    k = iter(ks)
    p = {}
    p["embedding"] = 0.1 * jax.random.normal(next(k), (vocab_size, E), jnp.float32)

    def conv_bn(cin, cout):
        return {
            "w": 0.1 * jax.random.normal(next(k), (cout, cin, 3), jnp.float32),  # (Cout,Cin,K)
            "b": 0.1 * jax.random.normal(next(k), (cout,), jnp.float32),
            "gamma": 1.0 + 0.1 * jax.random.normal(next(k), (cout,), jnp.float32),
            "beta": 0.1 * jax.random.normal(next(k), (cout,), jnp.float32),
            "mean": 0.05 * jax.random.normal(next(k), (cout,), jnp.float32),
            "var": 1.0 + 0.1 * jax.random.uniform(next(k), (cout,), jnp.float32),
        }

    def linear(cin, cout):
        return {
            "w": 0.1 * jax.random.normal(next(k), (cout, cin), jnp.float32),  # (out,in)
            "b": 0.1 * jax.random.normal(next(k), (cout,), jnp.float32),
        }

    p["conv1"] = conv_bn(E, E)
    p["conv2"] = conv_bn(E, 2 * E)
    p["conv3"] = conv_bn(2 * E, E)
    p["intent_num"] = linear(E, max_intents)
    p["intent"] = linear(E, n_intent)
    p["slot"] = linear(E, n_slot)
    return p


def _fold_conv_bn(c, eps=1e-5):
    # Fold eval-mode BN into the conv; taps stacked [k=0 (t-1); k=1 (t); k=2 (t+1)].
    scale = c["gamma"] / jnp.sqrt(c["var"] + eps)                  # (Cout,)
    w = jnp.transpose(c["w"], (2, 1, 0)) * scale[None, None, :]    # (K, Cin, Cout)
    K, Cin, Cout = w.shape
    b = (c["b"] - c["mean"]) * scale + c["beta"]                   # (Cout,)
    return w.reshape(K * Cin, Cout), b


def _pack_params(params, compute_dtype):
    """Pack every weight into one lane-dense (VPAD+13E, HPAD) slab + one bias slab."""
    V, E = params["embedding"].shape
    MI = params["intent_num"]["w"].shape[0]
    NI = params["intent"]["w"].shape[0]
    NS = params["slot"]["w"].shape[0]
    H = MI + NI + NS
    HPAD = max(128, int(pl.cdiv(H, 128)) * 128)
    VPAD = max(128, int(pl.cdiv(V, 128)) * 128)
    assert E % 8 == 0 and 2 * E <= HPAD and E <= VPAD

    w1, b1 = _fold_conv_bn(params["conv1"])      # (3E, E)
    w2, b2 = _fold_conv_bn(params["conv2"])      # (3E, 2E)
    w3, b3 = _fold_conv_bn(params["conv3"])      # (6E, E)
    wh = jnp.concatenate([params["intent_num"]["w"].T, params["intent"]["w"].T,
                          params["slot"]["w"].T], axis=1)                 # (E, H)
    bh = jnp.concatenate([params["intent_num"]["b"], params["intent"]["b"],
                          params["slot"]["b"]])                           # (H,)

    rows = VPAD + 13 * E
    w_slab = jnp.zeros((rows, HPAD), jnp.float32)
    w_slab = w_slab.at[0:V, 0:E].set(params["embedding"])
    w_slab = w_slab.at[VPAD:VPAD + 3 * E, 0:E].set(w1)
    w_slab = w_slab.at[VPAD + 3 * E:VPAD + 6 * E, 0:2 * E].set(w2)
    w_slab = w_slab.at[VPAD + 6 * E:VPAD + 12 * E, 0:E].set(w3)
    w_slab = w_slab.at[VPAD + 12 * E:VPAD + 13 * E, 0:H].set(wh)
    w_slab = w_slab.astype(compute_dtype)

    b_slab = jnp.zeros((4, HPAD), jnp.float32)
    b_slab = b_slab.at[0, 0:E].set(b1)
    b_slab = b_slab.at[1, 0:2 * E].set(b2)
    b_slab = b_slab.at[2, 0:E].set(b3)
    b_slab = b_slab.at[3, 0:H].set(bh)

    dims = dict(V=V, E=E, MI=MI, NI=NI, NS=NS, H=H, HPAD=HPAD, VPAD=VPAD)
    return w_slab, b_slab, dims


def cnn_forward(x_tokens, params, *, compute_dtype=jnp.float32):
    B, L = x_tokens.shape
    w_slab, b_slab, d = _pack_params(params, compute_dtype)
    E, VPAD, HPAD = d["E"], d["VPAD"], d["HPAD"]
    MI, NI, NS, H = d["MI"], d["NI"], d["NS"], d["H"]

    N = B * L
    pool_rows = max(8, ((B + 7) // 8) * 8)   # 8-aligned pooled-row staging region
    R = pool_rows + N

    tok = x_tokens.reshape(N, 1).astype(jnp.int32)
    pos = jnp.arange(N, dtype=jnp.int32) % L
    masks = jnp.stack([(pos != 0), (pos != L - 1)], axis=1).astype(jnp.float32)  # (N,2)

    kernel = functools.partial(cnn_kernel, batch=B, seq_len=L, embed_dim=E,
                               vocab_pad=VPAD, pool_rows=pool_rows)
    full = lambda shape: pl.BlockSpec(shape, lambda i: (0,) * len(shape))

    out = pl.pallas_call(
        kernel,
        out_shape=jax.ShapeDtypeStruct((R, HPAD), jnp.float32),
        grid_spec=pltpu.PrefetchScalarGridSpec(
            num_scalar_prefetch=0,
            # Whole (tiny) problem in one grid step: at N=B*L=32 the kernel is
            # launch/DMA-bound and extra steps only add ~0.35us each.  For large
            # B/N, tile rows here with a leading "parallel" axis (v7x: 2 TCs) using
            # 8-aligned row tiles sized to the 64 MiB (v7x) / 128 MiB VMEM budget.
            grid=(1,),
            in_specs=[full((N, 1)), full((N, 2)),
                      full(w_slab.shape), full(b_slab.shape)],
            out_specs=full((R, HPAD)),
        ),
        compiler_params=pltpu.CompilerParams(
            dimension_semantics=("arbitrary",),
            vmem_limit_bytes=32 * 1024 * 1024),
    )(tok, masks, w_slab, b_slab)

    ic = out[:B, :MI]                                     # intent_num_classifier
    it = out[:B, MI:MI + NI]                              # intent_classifier
    sl = out[pool_rows:, MI + NI:H].reshape(B, L, NS)     # slot_classifier
    return ic, it, sl


# ---------------------------------------------------------------------------
# Pure-JAX reference (mirrors the PyTorch forward, eval mode)
# ---------------------------------------------------------------------------
def reference(x_tokens, p, eps=1e-5):
    prec = lax.Precision.HIGHEST
    emb = p["embedding"][x_tokens]                  # (B, L, E)
    h = jnp.transpose(emb, (0, 2, 1))               # (B, E, L)  NCL like PyTorch

    def conv_bn_relu(h, c):
        y = lax.conv_general_dilated(h, c["w"], (1,), [(1, 1)],
                                     dimension_numbers=("NCH", "OIH", "NCH"),
                                     precision=prec)
        y = y + c["b"][None, :, None]
        y = ((y - c["mean"][None, :, None]) / jnp.sqrt(c["var"][None, :, None] + eps)
             * c["gamma"][None, :, None] + c["beta"][None, :, None])
        return jnp.maximum(y, 0.0)

    o1 = conv_bn_relu(h, p["conv1"])
    o2 = conv_bn_relu(o1, p["conv2"])
    o3 = conv_bn_relu(o2, p["conv3"])
    pooled = jnp.max(o3, axis=-1)                   # (B, E)
    c_out_t = jnp.transpose(o3, (0, 2, 1))          # (B, L, E)
    ic = jnp.matmul(pooled, p["intent_num"]["w"].T, precision=prec) + p["intent_num"]["b"]
    it = jnp.matmul(pooled, p["intent"]["w"].T, precision=prec) + p["intent"]["b"]
    sl = jnp.matmul(c_out_t, p["slot"]["w"].T, precision=prec) + p["slot"]["b"]
    return ic, it, sl


# ---------------------------------------------------------------------------
if __name__ == "__main__":
    vocab_size, embed_dim = 100, 32
    num_intent_labels, num_slot_labels, max_intents = 8, 12, 4
    B, L = 2, 16

    key = jax.random.PRNGKey(0)
    k_params, k_tok = jax.random.split(key)
    params = init_params(k_params, vocab_size, embed_dim,
                         num_intent_labels, num_slot_labels, max_intents)
    x_tokens = jax.random.randint(k_tok, (B, L), 0, vocab_size, dtype=jnp.int32)

    ic_r, it_r, sl_r = reference(x_tokens, params)

    # Exact path (f32 MXU operands): matches PyTorch eval numerics.
    ic, it, sl = cnn_forward(x_tokens, params, compute_dtype=jnp.float32)
    jax.block_until_ready((ic, it, sl))
    assert ic.shape == (B, max_intents) and it.shape == (B, num_intent_labels)
    assert sl.shape == (B, L, num_slot_labels)
    assert jnp.allclose(ic, ic_r, atol=1e-3, rtol=1e-3)
    assert jnp.allclose(it, it_r, atol=1e-3, rtol=1e-3)
    assert jnp.allclose(sl, sl_r, atol=1e-3, rtol=1e-3)

    # Fast path (bf16 MXU operands, f32 accumulation): native MXU dtype, half the
    # weight DMA bytes; validated at a looser tolerance.
    icb, itb, slb = cnn_forward(x_tokens, params, compute_dtype=jnp.bfloat16)
    jax.block_until_ready((icb, itb, slb))
    assert jnp.allclose(icb, ic_r, atol=5e-2, rtol=5e-2)
    assert jnp.allclose(itb, it_r, atol=5e-2, rtol=5e-2)
    assert jnp.allclose(slb, sl_r, atol=5e-2, rtol=5e-2)

    print("KERNEL_OK")
</pallas_src>

<mosaic_0001>
module attributes {stable_mosaic.version = 11 : i64} {
  func.func @cnn_kernel(%arg0: i32, %arg1: memref<32x1xi32, #tpu.memory_space<vmem>>, %arg2: memref<32x2xf32, #tpu.memory_space<vmem>>, %arg3: memref<544x128xf32, #tpu.memory_space<vmem>>, %arg4: memref<4x128xf32, #tpu.memory_space<vmem>>, %arg5: memref<40x128xf32, #tpu.memory_space<vmem>>) attributes {dimension_semantics = [#tpu.dimension_semantics<arbitrary>], iteration_bounds = array<i64: 1>, scalar_prefetch = 0 : i64, scratch_operands = 0 : i64, tpu.core_type = #tpu.core_type<tc>, window_params = [{pipeline_mode = #tpu.pipeline_mode<synchronous>, transform_indices = @transform_0, window_bounds = array<i64: 32, 1>}, {pipeline_mode = #tpu.pipeline_mode<synchronous>, transform_indices = @transform_1, window_bounds = array<i64: 32, 2>}, {pipeline_mode = #tpu.pipeline_mode<synchronous>, transform_indices = @transform_2, window_bounds = array<i64: 544, 128>}, {pipeline_mode = #tpu.pipeline_mode<synchronous>, transform_indices = @transform_3, window_bounds = array<i64: 4, 128>}, {pipeline_mode = #tpu.pipeline_mode<synchronous>, transform_indices = @transform_4, window_bounds = array<i64: 40, 128>}]} {
    %c0 = arith.constant 0 : index
    %c0_0 = arith.constant 0 : index
    %0 = vector.load %arg4[%c0, %c0_0] : memref<4x128xf32, #tpu.memory_space<vmem>>, vector<4x128xf32>
    %c0_1 = arith.constant 0 : index
    %c0_2 = arith.constant 0 : index
    %1 = vector.load %arg2[%c0_1, %c0_2] : memref<32x2xf32, #tpu.memory_space<vmem>>, vector<32x2xf32>
    %2 = vector.extract_strided_slice %1 {offsets = [0, 0], sizes = [32, 1], strides = [1, 1]} : vector<32x2xf32> to vector<32x1xf32>
    %3 = vector.extract_strided_slice %1 {offsets = [0, 1], sizes = [32, 1], strides = [1, 1]} : vector<32x2xf32> to vector<32x1xf32>
    %4 = vector.shape_cast %2 : vector<32x1xf32> to vector<32x1xf32>
    %5 = vector.broadcast %4 : vector<32x1xf32> to vector<32x32xf32>
    %6 = vector.shape_cast %3 : vector<32x1xf32> to vector<32x1xf32>
    %7 = vector.broadcast %6 : vector<32x1xf32> to vector<32x32xf32>
    %8 = vector.shape_cast %2 : vector<32x1xf32> to vector<32x1xf32>
    %9 = vector.broadcast %8 : vector<32x1xf32> to vector<32x64xf32>
    %10 = vector.shape_cast %3 : vector<32x1xf32> to vector<32x1xf32>
    %11 = vector.broadcast %10 : vector<32x1xf32> to vector<32x64xf32>
    %12 = tpu.iota {dimensions = array<i32: 1>} : vector<32x128xi32>
    %c0_3 = arith.constant 0 : index
    %c0_4 = arith.constant 0 : index
    %13 = vector.load %arg1[%c0_3, %c0_4] : memref<32x1xi32, #tpu.memory_space<vmem>>, vector<32x1xi32>
    %14 = vector.broadcast %13 : vector<32x1xi32> to vector<32x128xi32>
    %15 = arith.cmpi eq, %12, %14 : vector<32x128xi32>
    %16 = arith.extui %15 : vector<32x128xi1> to vector<32x128xi32>
    %17 = arith.sitofp %16 : vector<32x128xi32> to vector<32x128xf32>
    %c0_5 = arith.constant 0 : index
    %c0_6 = arith.constant 0 : index
    %18 = vector.load %arg3[%c0_5, %c0_6] : memref<544x128xf32, #tpu.memory_space<vmem>>, vector<128x32xf32>
    %cst = arith.constant dense<0.000000e+00> : vector<32x32xf32>
    %19 = tpu.matmul %17, %18, %cst {dimension_numbers = #tpu.dot_dimension_numbers<[1], [0], [0], [1], [0, 0, 1, 1], [], []>} : vector<32x128xf32>, vector<128x32xf32>, vector<32x32xf32> -> vector<32x32xf32>
    %c1_i32 = arith.constant 1 : i32
    %20 = tpu.dynamic_rotate %19 by %c1_i32 dim 0 : vector<32x32xf32>, i32 -> vector<32x32xf32>
    %21 = arith.mulf %20, %5 : vector<32x32xf32>
    %c31_i32 = arith.constant 31 : i32
    %22 = tpu.dynamic_rotate %19 by %c31_i32 dim 0 : vector<32x32xf32>, i32 -> vector<32x32xf32>
    %23 = arith.mulf %22, %7 : vector<32x32xf32>
    %c128 = arith.constant 128 : index
    %c0_7 = arith.constant 0 : index
    %24 = vector.load %arg3[%c128, %c0_7] : memref<544x128xf32, #tpu.memory_space<vmem>>, vector<32x32xf32>
    %cst_8 = arith.constant dense<0.000000e+00> : vector<32x32xf32>
    %25 = tpu.matmul %21, %24, %cst_8 {dimension_numbers = #tpu.dot_dimension_numbers<[1], [0], [0], [1], [0, 0, 1, 1], [], []>} : vector<32x32xf32>, vector<32x32xf32>, vector<32x32xf32> -> vector<32x32xf32>
    %c160 = arith.constant 160 : index
    %c0_9 = arith.constant 0 : index
    %26 = vector.load %arg3[%c160, %c0_9] : memref<544x128xf32, #tpu.memory_space<vmem>>, vector<32x32xf32>
    %cst_10 = arith.constant dense<0.000000e+00> : vector<32x32xf32>
    %27 = tpu.matmul %19, %26, %cst_10 {dimension_numbers = #tpu.dot_dimension_numbers<[1], [0], [0], [1], [0, 0, 1, 1], [], []>} : vector<32x32xf32>, vector<32x32xf32>, vector<32x32xf32> -> vector<32x32xf32>
    %28 = arith.addf %25, %27 : vector<32x32xf32>
    %c192 = arith.constant 192 : index
    %c0_11 = arith.constant 0 : index
    %29 = vector.load %arg3[%c192, %c0_11] : memref<544x128xf32, #tpu.memory_space<vmem>>, vector<32x32xf32>
    %cst_12 = arith.constant dense<0.000000e+00> : vector<32x32xf32>
    %30 = tpu.matmul %23, %29, %cst_12 {dimension_numbers = #tpu.dot_dimension_numbers<[1], [0], [0], [1], [0, 0, 1, 1], [], []>} : vector<32x32xf32>, vector<32x32xf32>, vector<32x32xf32> -> vector<32x32xf32>
    %31 = arith.addf %28, %30 : vector<32x32xf32>
    %32 = vector.extract_strided_slice %0 {offsets = [0, 0], sizes = [1, 32], strides = [1, 1]} : vector<4x128xf32> to vector<1x32xf32>
    %33 = vector.broadcast %32 : vector<1x32xf32> to vector<32x32xf32>
    %34 = arith.addf %31, %33 : vector<32x32xf32>
    %cst_13 = arith.constant 0.000000e+00 : f32
    %35 = vector.broadcast %cst_13 : f32 to vector<32x32xf32>
    %36 = arith.maximumf %34, %35 : vector<32x32xf32>
    %c1_i32_14 = arith.constant 1 : i32
    %37 = tpu.dynamic_rotate %36 by %c1_i32_14 dim 0 : vector<32x32xf32>, i32 -> vector<32x32xf32>
    %38 = arith.mulf %37, %5 : vector<32x32xf32>
    %c31_i32_15 = arith.constant 31 : i32
    %39 = tpu.dynamic_rotate %36 by %c31_i32_15 dim 0 : vector<32x32xf32>, i32 -> vector<32x32xf32>
    %40 = arith.mulf %39, %7 : vector<32x32xf32>
    %c224 = arith.constant 224 : index
    %c0_16 = arith.constant 0 : index
    %41 = vector.load %arg3[%c224, %c0_16] : memref<544x128xf32, #tpu.memory_space<vmem>>, vector<32x64xf32>
    %cst_17 = arith.constant dense<0.000000e+00> : vector<32x64xf32>
    %42 = tpu.matmul %38, %41, %cst_17 {dimension_numbers = #tpu.dot_dimension_numbers<[1], [0], [0], [1], [0, 0, 1, 1], [], []>} : vector<32x32xf32>, vector<32x64xf32>, vector<32x64xf32> -> vector<32x64xf32>
    %c256 = arith.constant 256 : index
    %c0_18 = arith.constant 0 : index
    %43 = vector.load %arg3[%c256, %c0_18] : memref<544x128xf32, #tpu.memory_space<vmem>>, vector<32x64xf32>
    %cst_19 = arith.constant dense<0.000000e+00> : vector<32x64xf32>
    %44 = tpu.matmul %36, %43, %cst_19 {dimension_numbers = #tpu.dot_dimension_numbers<[1], [0], [0], [1], [0, 0, 1, 1], [], []>} : vector<32x32xf32>, vector<32x64xf32>, vector<32x64xf32> -> vector<32x64xf32>
    %45 = arith.addf %42, %44 : vector<32x64xf32>
    %c288 = arith.constant 288 : index
    %c0_20 = arith.constant 0 : index
    %46 = vector.load %arg3[%c288, %c0_20] : memref<544x128xf32, #tpu.memory_space<vmem>>, vector<32x64xf32>
    %cst_21 = arith.constant dense<0.000000e+00> : vector<32x64xf32>
    %47 = tpu.matmul %40, %46, %cst_21 {dimension_numbers = #tpu.dot_dimension_numbers<[1], [0], [0], [1], [0, 0, 1, 1], [], []>} : vector<32x32xf32>, vector<32x64xf32>, vector<32x64xf32> -> vector<32x64xf32>
    %48 = arith.addf %45, %47 : vector<32x64xf32>
    %49 = vector.extract_strided_slice %0 {offsets = [1, 0], sizes = [1, 64], strides = [1, 1]} : vector<4x128xf32> to vector<1x64xf32>
    %50 = vector.broadcast %49 : vector<1x64xf32> to vector<32x64xf32>
    %51 = arith.addf %48, %50 : vector<32x64xf32>
    %cst_22 = arith.constant 0.000000e+00 : f32
    %52 = vector.broadcast %cst_22 : f32 to vector<32x64xf32>
    %53 = arith.maximumf %51, %52 : vector<32x64xf32>
    %c1_i32_23 = arith.constant 1 : i32
    %54 = tpu.dynamic_rotate %53 by %c1_i32_23 dim 0 : vector<32x64xf32>, i32 -> vector<32x64xf32>
    %55 = arith.mulf %54, %9 : vector<32x64xf32>
    %c31_i32_24 = arith.constant 31 : i32
    %56 = tpu.dynamic_rotate %53 by %c31_i32_24 dim 0 : vector<32x64xf32>, i32 -> vector<32x64xf32>
    %57 = arith.mulf %56, %11 : vector<32x64xf32>
    %c320 = arith.constant 320 : index
    %c0_25 = arith.constant 0 : index
    %58 = vector.load %arg3[%c320, %c0_25] : memref<544x128xf32, #tpu.memory_space<vmem>>, vector<64x32xf32>
    %cst_26 = arith.constant dense<0.000000e+00> : vector<32x32xf32>
    %59 = tpu.matmul %55, %58, %cst_26 {dimension_numbers = #tpu.dot_dimension_numbers<[1], [0], [0], [1], [0, 0, 1, 1], [], []>} : vector<32x64xf32>, vector<64x32xf32>, vector<32x32xf32> -> vector<32x32xf32>
    %c384 = arith.constant 384 : index
    %c0_27 = arith.constant 0 : index
    %60 = vector.load %arg3[%c384, %c0_27] : memref<544x128xf32, #tpu.memory_space<vmem>>, vector<64x32xf32>
    %cst_28 = arith.constant dense<0.000000e+00> : vector<32x32xf32>
    %61 = tpu.matmul %53, %60, %cst_28 {dimension_numbers = #tpu.dot_dimension_numbers<[1], [0], [0], [1], [0, 0, 1, 1], [], []>} : vector<32x64xf32>, vector<64x32xf32>, vector<32x32xf32> -> vector<32x32xf32>
    %62 = arith.addf %59, %61 : vector<32x32xf32>
    %c448 = arith.constant 448 : index
    %c0_29 = arith.constant 0 : index
    %63 = vector.load %arg3[%c448, %c0_29] : memref<544x128xf32, #tpu.memory_space<vmem>>, vector<64x32xf32>
    %cst_30 = arith.constant dense<0.000000e+00> : vector<32x32xf32>
    %64 = tpu.matmul %57, %63, %cst_30 {dimension_numbers = #tpu.dot_dimension_numbers<[1], [0], [0], [1], [0, 0, 1, 1], [], []>} : vector<32x64xf32>, vector<64x32xf32>, vector<32x32xf32> -> vector<32x32xf32>
    %65 = arith.addf %62, %64 : vector<32x32xf32>
    %66 = vector.extract_strided_slice %0 {offsets = [2, 0], sizes = [1, 32], strides = [1, 1]} : vector<4x128xf32> to vector<1x32xf32>
    %67 = vector.broadcast %66 : vector<1x32xf32> to vector<32x32xf32>
    %68 = arith.addf %65, %67 : vector<32x32xf32>
    %cst_31 = arith.constant 0.000000e+00 : f32
    %69 = vector.broadcast %cst_31 : f32 to vector<32x32xf32>
    %70 = arith.maximumf %68, %69 : vector<32x32xf32>
    %71 = vector.shape_cast %70 : vector<32x32xf32> to vector<2x16x32xf32>
    %cst_32 = arith.constant dense<0xFF800000> : vector<2x32xf32>
    %72 = vector.multi_reduction <maximumf>, %71, %cst_32 [1] : vector<2x16x32xf32> to vector<2x32xf32>
    %cst_33 = arith.constant 0.000000e+00 : f32
    %73 = vector.broadcast %cst_33 : f32 to vector<6x32xf32>
    %74 = tpu.concatenate %72, %73, %70 in 0 : vector<2x32xf32>, vector<6x32xf32>, vector<32x32xf32> -> vector<40x32xf32>
    %c512 = arith.constant 512 : index
    %c0_34 = arith.constant 0 : index
    %75 = vector.load %arg3[%c512, %c0_34] : memref<544x128xf32, #tpu.memory_space<vmem>>, vector<32x128xf32>
    %cst_35 = arith.constant dense<0.000000e+00> : vector<40x128xf32>
    %76 = tpu.matmul %74, %75, %cst_35 {dimension_numbers = #tpu.dot_dimension_numbers<[1], [0], [0], [1], [0, 0, 1, 1], [], []>} : vector<40x32xf32>, vector<32x128xf32>, vector<40x128xf32> -> vector<40x128xf32>
    %77 = vector.extract_strided_slice %0 {offsets = [3, 0], sizes = [1, 128], strides = [1, 1]} : vector<4x128xf32> to vector<1x128xf32>
    %78 = vector.broadcast %77 : vector<1x128xf32> to vector<40x128xf32>
    %79 = arith.addf %76, %78 : vector<40x128xf32>
    %c0_36 = arith.constant 0 : index
    %c0_37 = arith.constant 0 : index
    %80 = vector.load %arg5[%c0_36, %c0_37] : memref<40x128xf32, #tpu.memory_space<vmem>>, vector<40x128xf32>
    tpu.vector_store %arg5[%c0_36, %c0_37], %79 {strides = array<i32>} : memref<40x128xf32, #tpu.memory_space<vmem>>, vector<40x128xf32>,
    return
  }
  func.func @transform_0(%arg0: i32) -> (i32, i32) {
    %c0_i32 = arith.constant 0 : i32
    %c0_i32_0 = arith.constant 0 : i32
    %c0_i32_1 = arith.constant 0 : i32
    return %c0_i32, %c0_i32_0 : i32, i32
  }
  func.func @transform_1(%arg0: i32) -> (i32, i32) {
    %c0_i32 = arith.constant 0 : i32
    %c0_i32_0 = arith.constant 0 : i32
    %c0_i32_1 = arith.constant 0 : i32
    return %c0_i32, %c0_i32_0 : i32, i32
  }
  func.func @transform_2(%arg0: i32) -> (i32, i32) {
    %c0_i32 = arith.constant 0 : i32
    %c0_i32_0 = arith.constant 0 : i32
    %c0_i32_1 = arith.constant 0 : i32
    return %c0_i32, %c0_i32_0 : i32, i32
  }
  func.func @transform_3(%arg0: i32) -> (i32, i32) {
    %c0_i32 = arith.constant 0 : i32
    %c0_i32_0 = arith.constant 0 : i32
    %c0_i32_1 = arith.constant 0 : i32
    return %c0_i32, %c0_i32_0 : i32, i32
  }
  func.func @transform_4(%arg0: i32) -> (i32, i32) {
    %c0_i32 = arith.constant 0 : i32
    %c0_i32_0 = arith.constant 0 : i32
    %c0_i32_1 = arith.constant 0 : i32
    return %c0_i32, %c0_i32_0 : i32, i32
  }
}

</mosaic_0001>

<llo_original>
// kernel: tpu_custom_call.1
$region0: #{tpu_custom_call.1}
  #allocation0 [shape = 'u32[]', space=smem, size = 0x4, offset = 0x4, fixed_abs, tag = 'smem constant byte address 0x4 - core index']
  #allocation1 [shape = 'u32[144,128]{1,0:T(1,128)}', space=vmem, size = 0x12000, scoped, tag = 'internal scratch']
  %s0 = inlined_call_operand.vmem [shape: s32[32,1], index: 0, kind: input, shape index: {}]
  %s1 = inlined_call_operand.vmem [shape: f32[32,2], index: 1, kind: input, shape index: {}]
  %s2 = inlined_call_operand.hbm [shape: f32[544,128], index: 2, kind: input, shape index: {}]
  %s3 = inlined_call_operand.vmem [shape: f32[4,128], index: 3, kind: input, shape index: {}]
  %s4 = inlined_call_operand.hbm [shape: f32[40,128], index: 4, kind: output, shape index: {}]
  %s5 = sld [smem:[#allocation0]]
  $region30: #{tpu_custom_call.1} parent=0
    _
  %s7 = ssub.s32 1, %s5
  %s8 = scalar_select 0, %s7, %s5
  $region1: #{tpu_custom_call.1} parent=0
    #allocation2 [shape = 'u8[278528]{0}', space=vmem, size = 0x44000, scoped, tag = 'input window, operand 2, single buffered']
    #allocation3 [shape = 's32[1]{0}', space=sflag, size = 0x4, scoped, tag = 'scoped memory for tpu_custom_call.1']
    #allocation4 [shape = 's32[1]{0}', space=sflag, size = 0x4, scoped, tag = 'scoped memory for tpu_custom_call.1']
    #allocation5 [shape = 'u8[20480]{0}', space=vmem, size = 0x5000, scoped, tag = 'output window, operand 0, single buffered']
    %9 = vsyncpa [#allocation3], 0
    %10 = vsyncpa [#allocation4], 0
    // Predicated region
    $region2: #{tpu_custom_call.1} parent=1 // pred_check
      _
    $region3: #{tpu_custom_call.1} parent=1 // pred_check_branch
      %12 = sbr.rel (0) target = $region5
    $region4: #{tpu_custom_call.1} parent=1 // pred_region
      _
    $region5: #{tpu_custom_call.1} parent=1 // pred_fallthru
      _
    // Predicated region
    $region6: #{tpu_custom_call.1} parent=1 // pred_check
      _
    $region7: #{tpu_custom_call.1} parent=1 // pred_check_branch
      %14 = sbr.rel (0) target = $region9
    $region8: #{tpu_custom_call.1} parent=1 // pred_region
      _
    $region9: #{tpu_custom_call.1} parent=1 // pred_fallthru
      _
    // Predicated region
    $region10: #{tpu_custom_call.1} parent=1 // pred_check
      _
    $region11: #{tpu_custom_call.1} parent=1 // pred_check_branch
      %16 = sbr.rel (0) target = $region13
    $region12: #{tpu_custom_call.1} parent=1 // pred_region
      %s18 = ssub.s32 8704, 8704
      %19 = vsyncadd [#allocation3], %s18
      %s20 = sshll.u32 [#allocation2], 4
      %s21 = int_to_ptr.vmem [resolvable:$true] %s20
      %26 = dma.hbm_to_vmem [thread:$0]  %s2, 8704, %s21, [#allocation3], 128, 128, 8
    $region13: #{tpu_custom_call.1} parent=1 // pred_fallthru
      _
    // Predicated region
    $region14: #{tpu_custom_call.1} parent=1 // pred_check
      _
    $region15: #{tpu_custom_call.1} parent=1 // pred_check_branch
      %28 = sbr.rel (0) target = $region17
    $region16: #{tpu_custom_call.1} parent=1 // pred_region
      _
    $region17: #{tpu_custom_call.1} parent=1 // pred_fallthru
      _
    // Predicated region
    $region18: #{tpu_custom_call.1} parent=1 // pred_check
      _
    $region19: #{tpu_custom_call.1} parent=1 // pred_check_branch
      %30 = sbr.rel (0) target = $region21
    $region20: #{tpu_custom_call.1} parent=1 // pred_region
      %31 = dma.done [#allocation3], 8704
    $region21: #{tpu_custom_call.1} parent=1 // pred_fallthru
      _
    %v32 = vld [vmem:[%s3] sm:$0xf]
    %v33 = vld [vmem:[%s1] sm:$0xff]
    %v34 = vld [vmem:[%s1 + $0x8] sm:$0xff]
    %v35 = vld [vmem:[%s1 + $0x10] sm:$0xff]
    %v36 = vld [vmem:[%s1 + $0x18] sm:$0xff]
    %38 = vset.pattern.permute.xlu0 0
    %39 = vperm.xlu0 %38, %v33
    %v40 = vpop.permute.xlu0 %39
    %43 = vset.pattern.permute.xlu0 0
    %44 = vperm.xlu0 %43, %v34
    %v45 = vpop.permute.xlu0 %44
    %48 = vset.pattern.permute.xlu0 0
    %49 = vperm.xlu0 %48, %v35
    %v50 = vpop.permute.xlu0 %49
    %53 = vset.pattern.permute.xlu0 0
    %54 = vperm.xlu0 %53, %v36
    %v55 = vpop.permute.xlu0 %54
    %57 = vset.pattern.permute.xlu0 1
    %58 = vperm.xlu0 %57, %v33
    %v59 = vpop.permute.xlu0 %58
    %61 = vset.pattern.permute.xlu0 1
    %62 = vperm.xlu0 %61, %v34
    %v63 = vpop.permute.xlu0 %62
    %65 = vset.pattern.permute.xlu0 1
    %66 = vperm.xlu0 %65, %v35
    %v67 = vpop.permute.xlu0 %66
    %69 = vset.pattern.permute.xlu0 1
    %70 = vperm.xlu0 %69, %v36
    %v71 = vpop.permute.xlu0 %70
    %v73 = vlaneseq
    %v74 = vand.u32 %v73, 127
    %v75 = vld [vmem:[%s0] sm:$0xff]
    %v76 = vld [vmem:[%s0 + $0x8] sm:$0xff]
    %v77 = vld [vmem:[%s0 + $0x10] sm:$0xff]
    %v78 = vld [vmem:[%s0 + $0x18] sm:$0xff]
    %79 = vset.pattern.permute.xlu0 0
    %80 = vperm.xlu0 %79, %v75
    %v81 = vpop.permute.xlu0 %80
    %82 = vset.pattern.permute.xlu0 0
    %83 = vperm.xlu0 %82, %v76
    %v84 = vpop.permute.xlu0 %83
    %85 = vset.pattern.permute.xlu0 0
    %86 = vperm.xlu0 %85, %v77
    %v87 = vpop.permute.xlu0 %86
    %88 = vset.pattern.permute.xlu0 0
    %89 = vperm.xlu0 %88, %v78
    %v90 = vpop.permute.xlu0 %89
    %vm91 = vcmp.eq.s32.totalorder %v74, %v81
    %vm92 = vcmp.eq.s32.totalorder %v74, %v84
    %vm93 = vcmp.eq.s32.totalorder %v74, %v87
    %vm94 = vcmp.eq.s32.totalorder %v74, %v90
    %v95 = vsel %vm91, 1, 0
    %v96 = vsel %vm92, 1, 0
    %v97 = vsel %vm93, 1, 0
    %v98 = vsel %vm94, 1, 0
    %v99 = vcvt.s32.f32 %v95
    %v100 = vcvt.s32.f32 %v96
    %v101 = vcvt.s32.f32 %v97
    %v102 = vcvt.s32.f32 %v98
    %v103 = vld [vmem:[#allocation2] sm:$0xff]
    %v104 = vld [vmem:[#allocation2 + $0x8] sm:$0xff]
    %v105 = vld [vmem:[#allocation2 + $0x10] sm:$0xff]
    %v106 = vld [vmem:[#allocation2 + $0x18] sm:$0xff]
    %v107 = vld [vmem:[#allocation2 + $0x20] sm:$0xff]
    %v108 = vld [vmem:[#allocation2 + $0x28] sm:$0xff]
    %v109 = vld [vmem:[#allocation2 + $0x30] sm:$0xff]
    %v110 = vld [vmem:[#allocation2 + $0x38] sm:$0xff]
    %v111 = vld [vmem:[#allocation2 + $0x40] sm:$0xff]
    %v112 = vld [vmem:[#allocation2 + $0x48] sm:$0xff]
    %v113 = vld [vmem:[#allocation2 + $0x50] sm:$0xff]
    %v114 = vld [vmem:[#allocation2 + $0x58] sm:$0xff]
    %v115 = vld [vmem:[#allocation2 + $0x60] sm:$0xff]
    %v116 = vld [vmem:[#allocation2 + $0x68] sm:$0xff]
    %v117 = vld [vmem:[#allocation2 + $0x70] sm:$0xff]
    %v118 = vld [vmem:[#allocation2 + $0x78] sm:$0xff]
    %119 = vmatprep.subr.mxu0 0.0
    %120 = vmatpush1.msra.mxu0 %v103
    %121 = vmatprep.subr.mxu0 0.0
    %122 = vmatpush1.msra.mxu0 %v104
    %123 = vmatprep.subr.mxu0 0.0
    %124 = vmatpush1.msra.mxu0 %v105
    %125 = vmatprep.subr.mxu0 0.0
    %126 = vmatpush1.msra.mxu0 %v106
    %127 = vmatprep.subr.mxu0 0.0
    %128 = vmatpush1.msra.mxu0 %v107
    %129 = vmatprep.subr.mxu0 0.0
    %130 = vmatpush1.msra.mxu0 %v108
    %131 = vmatprep.subr.mxu0 0.0
    %132 = vmatpush1.msra.mxu0 %v109
    %133 = vmatprep.subr.mxu0 0.0
    %134 = vmatpush1.msra.mxu0 %v110
    %135 = vmatprep.subr.mxu0 0.0
    %136 = vmatpush1.msra.mxu0 %v111
    %137 = vmatprep.subr.mxu0 0.0
    %138 = vmatpush1.msra.mxu0 %v112
    %139 = vmatprep.subr.mxu0 0.0
    %140 = vmatpush1.msra.mxu0 %v113
    %141 = vmatprep.subr.mxu0 0.0
    %142 = vmatpush1.msra.mxu0 %v114
    %143 = vmatprep.subr.mxu0 0.0
    %144 = vmatpush1.msra.mxu0 %v115
    %145 = vmatprep.subr.mxu0 0.0
    %146 = vmatpush1.msra.mxu0 %v116
    %147 = vmatprep.subr.mxu0 0.0
    %148 = vmatpush1.msra.mxu0 %v117
    %149 = vmatprep.subr.mxu0 0.0
    %150 = vmatpush1.msra.mxu0 %v118
    %151 = vmatprep.subr.mxu0 0.0
    %152 = vmatpush1.msra.mxu0 0.0
    %153 = vmatprep.subr.mxu0 0.0
    %154 = vmatpush1.msra.mxu0 0.0
    %155 = vmatprep.subr.mxu0 0.0
    %156 = vmatpush1.msra.mxu0 0.0
    %157 = vmatprep.subr.mxu0 0.0
    %158 = vmatpush1.msra.mxu0 0.0
    %159 = vmatprep.subr.mxu0 0.0
    %160 = vmatpush1.msra.mxu0 0.0
    %161 = vmatprep.subr.mxu0 0.0
    %162 = vmatpush1.msra.mxu0 0.0
    %163 = vmatprep.subr.mxu0 0.0
    %164 = vmatpush1.msra.mxu0 0.0
    %165 = vmatprep.subr.mxu0 0.0
    %166 = vmatpush1.msra.mxu0 0.0
    %167 = vmatprep.subr.mxu0 0.0
    %168 = vmatpush1.msra.mxu0 0.0
    %169 = vmatprep.subr.mxu0 0.0
    %170 = vmatpush1.msra.mxu0 0.0
    %171 = vmatprep.subr.mxu0 0.0
    %172 = vmatpush1.msra.mxu0 0.0
    %173 = vmatprep.subr.mxu0 0.0
    %174 = vmatpush1.msra.mxu0 0.0
    %175 = vmatprep.subr.mxu0 0.0
    %176 = vmatpush1.msra.mxu0 0.0
    %177 = vmatprep.subr.mxu0 0.0
    %178 = vmatpush1.msra.mxu0 0.0
    %179 = vmatprep.subr.mxu0 0.0
    %180 = vmatpush1.msra.mxu0 0.0
    %181 = vmatprep.subr.mxu0 0.0
    %182 = vmatpush1.msra.mxu0 0.0
    %183 = vmatprep.mubr.f32.mxu0 0.0
    %184 = vmatmul.mubr.f32.gmra.mrb[0].mxu0 %v99
    %v185 = vpop.f32.mrb[0].mxu0
    %v186 = vadd.f32 0.0, %v185
    %v187 = vpop.f32.mrb[0].mxu0
    %188 = vmatprep.mubr.f32.mxu0 0.0
    %189 = vmatmul.mubr.f32.gmra.mrb[0].mxu0 %v100
    %v190 = vpop.f32.mrb[0].mxu0
    %v191 = vadd.f32 0.0, %v190
    %v192 = vpop.f32.mrb[0].mxu0
    %193 = vmatprep.mubr.f32.mxu0 0.0
    %194 = vmatmul.mubr.f32.gmra.mrb[0].mxu0 %v101
    %v195 = vpop.f32.mrb[0].mxu0
    %v196 = vadd.f32 0.0, %v195
    %v197 = vpop.f32.mrb[0].mxu0
    %198 = vmatprep.mubr.f32.mxu0 0.0
    %199 = vmatmul.mubr.f32.gmra.mrb[0].mxu0 %v102
    %v200 = vpop.f32.mrb[0].mxu0
    %v201 = vadd.f32 0.0, %v200
    %v202 = vpop.f32.mrb[0].mxu0
    %203 = vdwg.mxu0
    %v204 = vrot.slane %v186, 7
    %v205 = vrot.slane %v191, 7
    %v206 = vrot.slane %v196, 7
    %v207 = vrot.slane %v201, 7
    %v208 = vlaneseq
    %v209 = vshrl.u32 %v208, 7
    %vm210 = vcmp.lt.s32.totalorder %v209, 1
    %v211 = vsel %vm210, %v206, %v207
    %v212 = vsel %vm210, %v205, %v206
    %v213 = vsel %vm210, %v204, %v205
    %v214 = vsel %vm210, %v207, %v204
    %v215 = vmul.f32 %v214, %v40
    %v216 = vmul.f32 %v213, %v45
    %v217 = vmul.f32 %v212, %v50
    %v218 = vmul.f32 %v211, %v55
    %v219 = vrot.slane %v186, 1
    %v220 = vrot.slane %v191, 1
    %v221 = vrot.slane %v196, 1
    %v222 = vrot.slane %v201, 1
    %vm223 = vcmp.lt.s32.totalorder %v209, 7
    %v224 = vsel %vm223, %v221, %v222
    %v225 = vsel %vm223, %v220, %v221
    %v226 = vsel %vm223, %v219, %v220
    %v227 = vsel %vm223, %v222, %v219
    %v228 = vmul.f32 %v226, %v59
    %v229 = vmul.f32 %v225, %v63
    %v230 = vmul.f32 %v224, %v67
    %v231 = vmul.f32 %v227, %v71
    %v232 = vld [vmem:[#allocation2 + $0x80] sm:$0xff]
    %v233 = vld [vmem:[#allocation2 + $0x88] sm:$0xff]
    %v234 = vld [vmem:[#allocation2 + $0x90] sm:$0xff]
    %v235 = vld [vmem:[#allocation2 + $0x98] sm:$0xff]
    %v236 = vld [vmem:[#allocation2 + $0xa0] sm:$0xff]
    %v237 = vld [vmem:[#allocation2 + $0xa8] sm:$0xff]
    %v238 = vld [vmem:[#allocation2 + $0xb0] sm:$0xff]
    %v239 = vld [vmem:[#allocation2 + $0xb8] sm:$0xff]
    %vm240 = vcmask 261120
    %v242 = vsel %vm240, %v186, 0
    %v245 = vsel %vm240, %v191, 0
    %v248 = vsel %vm240, %v196, 0
    %v251 = vsel %vm240, %v201, 0
    %253 = vmatprep.subr.mxu0 0.0
    %254 = vmatpush1.msra.mxu0 %v236
    %255 = vmatprep.subr.mxu0 0.0
    %256 = vmatpush1.msra.mxu0 %v237
    %257 = vmatprep.subr.mxu0 0.0
    %258 = vmatpush1.msra.mxu0 %v238
    %259 = vmatprep.subr.mxu0 0.0
    %260 = vmatpush1.msra.mxu0 %v239
    %261 = vmatprep.subr.mxu0 0.0
    %262 = vmatpush1.msra.mxu0 0.0
    %263 = vmatprep.subr.mxu0 0.0
    %264 = vmatpush1.msra.mxu0 0.0
    %265 = vmatprep.subr.mxu0 0.0
    %266 = vmatpush1.msra.mxu0 0.0
    %267 = vmatprep.subr.mxu0 0.0
    %268 = vmatpush1.msra.mxu0 0.0
    %269 = vmatprep.subr.mxu0 0.0
    %270 = vmatpush1.msra.mxu0 0.0
    %271 = vmatprep.subr.mxu0 0.0
    %272 = vmatpush1.msra.mxu0 0.0
    %273 = vmatprep.subr.mxu0 0.0
    %274 = vmatpush1.msra.mxu0 0.0
    %275 = vmatprep.subr.mxu0 0.0
    %276 = vmatpush1.msra.mxu0 0.0
    %277 = vmatprep.subr.mxu0 0.0
    %278 = vmatpush1.msra.mxu0 0.0
    %279 = vmatprep.subr.mxu0 0.0
    %280 = vmatpush1.msra.mxu0 0.0
    %281 = vmatprep.subr.mxu0 0.0
    %282 = vmatpush1.msra.mxu0 0.0
    %283 = vmatprep.subr.mxu0 0.0
    %284 = vmatpush1.msra.mxu0 0.0
    %285 = vmatprep.subr.mxu0 0.0
    %286 = vmatpush1.msra.mxu0 0.0
    %287 = vmatprep.subr.mxu0 0.0
    %288 = vmatpush1.msra.mxu0 0.0
    %289 = vmatprep.subr.mxu0 0.0
    %290 = vmatpush1.msra.mxu0 0.0
    %291 = vmatprep.subr.mxu0 0.0
    %292 = vmatpush1.msra.mxu0 0.0
    %293 = vmatprep.subr.mxu0 0.0
    %294 = vmatpush1.msra.mxu0 0.0
    %295 = vmatprep.subr.mxu0 0.0
    %296 = vmatpush1.msra.mxu0 0.0
    %297 = vmatprep.subr.mxu0 0.0
    %298 = vmatpush1.msra.mxu0 0.0
    %299 = vmatprep.subr.mxu0 0.0
    %300 = vmatpush1.msra.mxu0 0.0
    %301 = vmatprep.subr.mxu0 0.0
    %302 = vmatpush1.msra.mxu0 0.0
    %303 = vmatprep.subr.mxu0 0.0
    %304 = vmatpush1.msra.mxu0 0.0
    %305 = vmatprep.subr.mxu0 0.0
    %306 = vmatpush1.msra.mxu0 0.0
    %307 = vmatprep.subr.mxu0 0.0
    %308 = vmatpush1.msra.mxu0 0.0
    %309 = vmatprep.subr.mxu0 0.0
    %310 = vmatpush1.msra.mxu0 0.0
    %311 = vmatprep.subr.mxu0 0.0
    %312 = vmatpush1.msra.mxu0 0.0
    %313 = vmatprep.subr.mxu0 0.0
    %314 = vmatpush1.msra.mxu0 0.0
    %315 = vmatprep.subr.mxu0 0.0
    %316 = vmatpush1.msra.mxu0 0.0
    %317 = vmatprep.mubr.f32.mxu0 0.0
    %318 = vmatmul.mubr.f32.gmra.mrb[0].mxu0 %v242
    %v319 = vpop.f32.mrb[0].mxu0
    %v320 = vadd.f32 0.0, %v319
    %v321 = vpop.f32.mrb[0].mxu0
    %322 = vmatprep.mubr.f32.mxu0 0.0
    %323 = vmatmul.mubr.f32.gmra.mrb[0].mxu0 %v245
    %v324 = vpop.f32.mrb[0].mxu0
    %v325 = vadd.f32 0.0, %v324
    %v326 = vpop.f32.mrb[0].mxu0
    %327 = vmatprep.mubr.f32.mxu0 0.0
    %328 = vmatmul.mubr.f32.gmra.mrb[0].mxu0 %v248
    %v329 = vpop.f32.mrb[0].mxu0
    %v330 = vadd.f32 0.0, %v329
    %v331 = vpop.f32.mrb[0].mxu0
    %332 = vmatprep.mubr.f32.mxu0 0.0
    %333 = vmatmul.mubr.f32.gmra.mrb[0].mxu0 %v251
    %v334 = vpop.f32.mrb[0].mxu0
    %v335 = vadd.f32 0.0, %v334
    %v336 = vpop.f32.mrb[0].mxu0
    %337 = vdwg.mxu0
    %v339 = vsel %vm240, %v215, 0
    %v342 = vsel %vm240, %v216, 0
    %v345 = vsel %vm240, %v217, 0
    %v348 = vsel %vm240, %v218, 0
    %350 = vmatprep.subr.mxu0 0.0
    %351 = vmatpush1.msra.mxu0 %v232
    %352 = vmatprep.subr.mxu0 0.0
    %353 = vmatpush1.msra.mxu0 %v233
    %354 = vmatprep.subr.mxu0 0.0
    %355 = vmatpush1.msra.mxu0 %v234
    %356 = vmatprep.subr.mxu0 0.0
    %357 = vmatpush1.msra.mxu0 %v235
    %358 = vmatprep.subr.mxu0 0.0
    %359 = vmatpush1.msra.mxu0 0.0
    %360 = vmatprep.subr.mxu0 0.0
    %361 = vmatpush1.msra.mxu0 0.0
    %362 = vmatprep.subr.mxu0 0.0
    %363 = vmatpush1.msra.mxu0 0.0
    %364 = vmatprep.subr.mxu0 0.0
    %365 = vmatpush1.msra.mxu0 0.0
    %366 = vmatprep.subr.mxu0 0.0
    %367 = vmatpush1.msra.mxu0 0.0
    %368 = vmatprep.subr.mxu0 0.0
    %369 = vmatpush1.msra.mxu0 0.0
    %370 = vmatprep.subr.mxu0 0.0
    %371 = vmatpush1.msra.mxu0 0.0
    %372 = vmatprep.subr.mxu0 0.0
    %373 = vmatpush1.msra.mxu0 0.0
    %374 = vmatprep.subr.mxu0 0.0
    %375 = vmatpush1.msra.mxu0 0.0
    %376 = vmatprep.subr.mxu0 0.0
    %377 = vmatpush1.msra.mxu0 0.0
    %378 = vmatprep.subr.mxu0 0.0
    %379 = vmatpush1.msra.mxu0 0.0
    %380 = vmatprep.subr.mxu0 0.0
    %381 = vmatpush1.msra.mxu0 0.0
    %382 = vmatprep.subr.mxu0 0.0
    %383 = vmatpush1.msra.mxu0 0.0
    %384 = vmatprep.subr.mxu0 0.0
    %385 = vmatpush1.msra.mxu0 0.0
    %386 = vmatprep.subr.mxu0 0.0
    %387 = vmatpush1.msra.mxu0 0.0
    %388 = vmatprep.subr.mxu0 0.0
    %389 = vmatpush1.msra.mxu0 0.0
    %390 = vmatprep.subr.mxu0 0.0
    %391 = vmatpush1.msra.mxu0 0.0
    %392 = vmatprep.subr.mxu0 0.0
    %393 = vmatpush1.msra.mxu0 0.0
    %394 = vmatprep.subr.mxu0 0.0
    %395 = vmatpush1.msra.mxu0 0.0
    %396 = vmatprep.subr.mxu0 0.0
    %397 = vmatpush1.msra.mxu0 0.0
    %398 = vmatprep.subr.mxu0 0.0
    %399 = vmatpush1.msra.mxu0 0.0
    %400 = vmatprep.subr.mxu0 0.0
    %401 = vmatpush1.msra.mxu0 0.0
    %402 = vmatprep.subr.mxu0 0.0
    %403 = vmatpush1.msra.mxu0 0.0
    %404 = vmatprep.subr.mxu0 0.0
    %405 = vmatpush1.msra.mxu0 0.0
    %406 = vmatprep.subr.mxu0 0.0
    %407 = vmatpush1.msra.mxu0 0.0
    %408 = vmatprep.subr.mxu0 0.0
    %409 = vmatpush1.msra.mxu0 0.0
    %410 = vmatprep.subr.mxu0 0.0
    %411 = vmatpush1.msra.mxu0 0.0
    %412 = vmatprep.subr.mxu0 0.0
    %413 = vmatpush1.msra.mxu0 0.0
    %414 = vmatprep.mubr.f32.mxu0 0.0
    %415 = vmatmul.mubr.f32.gmra.mrb[0].mxu0 %v339
    %v416 = vpop.f32.mrb[0].mxu0
    %v417 = vadd.f32 %v320, %v416
    %v418 = vpop.f32.mrb[0].mxu0
    %419 = vmatprep.mubr.f32.mxu0 0.0
    %420 = vmatmul.mubr.f32.gmra.mrb[0].mxu0 %v342
    %v421 = vpop.f32.mrb[0].mxu0
    %v422 = vadd.f32 %v325, %v421
    %v423 = vpop.f32.mrb[0].mxu0
    %424 = vmatprep.mubr.f32.mxu0 0.0
    %425 = vmatmul.mubr.f32.gmra.mrb[0].mxu0 %v345
    %v426 = vpop.f32.mrb[0].mxu0
    %v427 = vadd.f32 %v330, %v426
    %v428 = vpop.f32.mrb[0].mxu0
    %429 = vmatprep.mubr.f32.mxu0 0.0
    %430 = vmatmul.mubr.f32.gmra.mrb[0].mxu0 %v348
    %v431 = vpop.f32.mrb[0].mxu0
    %v432 = vadd.f32 %v335, %v431
    %v433 = vpop.f32.mrb[0].mxu0
    %434 = vdwg.mxu0
    %v435 = vld [vmem:[#allocation2 + $0xc0] sm:$0xff]
    %v436 = vld [vmem:[#allocation2 + $0xc8] sm:$0xff]
    %v437 = vld [vmem:[#allocation2 + $0xd0] sm:$0xff]
    %v438 = vld [vmem:[#allocation2 + $0xd8] sm:$0xff]
    %v440 = vsel %vm240, %v228, 0
    %v443 = vsel %vm240, %v229, 0
    %v446 = vsel %vm240, %v230, 0
    %v449 = vsel %vm240, %v231, 0
    %451 = vmatprep.subr.mxu0 0.0
    %452 = vmatpush1.msra.mxu0 %v435
    %453 = vmatprep.subr.mxu0 0.0
    %454 = vmatpush1.msra.mxu0 %v436
    %455 = vmatprep.subr.mxu0 0.0
    %456 = vmatpush1.msra.mxu0 %v437
    %457 = vmatprep.subr.mxu0 0.0
    %458 = vmatpush1.msra.mxu0 %v438
    %459 = vmatprep.subr.mxu0 0.0
    %460 = vmatpush1.msra.mxu0 0.0
    %461 = vmatprep.subr.mxu0 0.0
    %462 = vmatpush1.msra.mxu0 0.0
    %463 = vmatprep.subr.mxu0 0.0
    %464 = vmatpush1.msra.mxu0 0.0
    %465 = vmatprep.subr.mxu0 0.0
    %466 = vmatpush1.msra.mxu0 0.0
    %467 = vmatprep.subr.mxu0 0.0
    %468 = vmatpush1.msra.mxu0 0.0
    %469 = vmatprep.subr.mxu0 0.0
    %470 = vmatpush1.msra.mxu0 0.0
    %471 = vmatprep.subr.mxu0 0.0
    %472 = vmatpush1.msra.mxu0 0.0
    %473 = vmatprep.subr.mxu0 0.0
    %474 = vmatpush1.msra.mxu0 0.0
    %475 = vmatprep.subr.mxu0 0.0
    %476 = vmatpush1.msra.mxu0 0.0
    %477 = vmatprep.subr.mxu0 0.0
    %478 = vmatpush1.msra.mxu0 0.0
    %479 = vmatprep.subr.mxu0 0.0
    %480 = vmatpush1.msra.mxu0 0.0
    %481 = vmatprep.subr.mxu0 0.0
    %482 = vmatpush1.msra.mxu0 0.0
    %483 = vmatprep.subr.mxu0 0.0
    %484 = vmatpush1.msra.mxu0 0.0
    %485 = vmatprep.subr.mxu0 0.0
    %486 = vmatpush1.msra.mxu0 0.0
    %487 = vmatprep.subr.mxu0 0.0
    %488 = vmatpush1.msra.mxu0 0.0
    %489 = vmatprep.subr.mxu0 0.0
    %490 = vmatpush1.msra.mxu0 0.0
    %491 = vmatprep.subr.mxu0 0.0
    %492 = vmatpush1.msra.mxu0 0.0
    %493 = vmatprep.subr.mxu0 0.0
    %494 = vmatpush1.msra.mxu0 0.0
    %495 = vmatprep.subr.mxu0 0.0
    %496 = vmatpush1.msra.mxu0 0.0
    %497 = vmatprep.subr.mxu0 0.0
    %498 = vmatpush1.msra.mxu0 0.0
    %499 = vmatprep.subr.mxu0 0.0
    %500 = vmatpush1.msra.mxu0 0.0
    %501 = vmatprep.subr.mxu0 0.0
    %502 = vmatpush1.msra.mxu0 0.0
    %503 = vmatprep.subr.mxu0 0.0
    %504 = vmatpush1.msra.mxu0 0.0
    %505 = vmatprep.subr.mxu0 0.0
    %506 = vmatpush1.msra.mxu0 0.0
    %507 = vmatprep.subr.mxu0 0.0
    %508 = vmatpush1.msra.mxu0 0.0
    %509 = vmatprep.subr.mxu0 0.0
    %510 = vmatpush1.msra.mxu0 0.0
    %511 = vmatprep.subr.mxu0 0.0
    %512 = vmatpush1.msra.mxu0 0.0
    %513 = vmatprep.subr.mxu0 0.0
    %514 = vmatpush1.msra.mxu0 0.0
    %515 = vmatprep.mubr.f32.mxu0 0.0
    %516 = vmatmul.mubr.f32.gmra.mrb[0].mxu0 %v440
    %v517 = vpop.f32.mrb[0].mxu0
    %v518 = vadd.f32 0.0, %v517
    %v519 = vpop.f32.mrb[0].mxu0
    %520 = vmatprep.mubr.f32.mxu0 0.0
    %521 = vmatmul.mubr.f32.gmra.mrb[0].mxu0 %v443
    %v522 = vpop.f32.mrb[0].mxu0
    %v523 = vadd.f32 0.0, %v522
    %v524 = vpop.f32.mrb[0].mxu0
    %525 = vmatprep.mubr.f32.mxu0 0.0
    %526 = vmatmul.mubr.f32.gmra.mrb[0].mxu0 %v446
    %v527 = vpop.f32.mrb[0].mxu0
    %v528 = vadd.f32 0.0, %v527
    %v529 = vpop.f32.mrb[0].mxu0
    %530 = vmatprep.mubr.f32.mxu0 0.0
    %531 = vmatmul.mubr.f32.gmra.mrb[0].mxu0 %v449
    %v532 = vpop.f32.mrb[0].mxu0
    %v533 = vadd.f32 0.0, %v532
    %v534 = vpop.f32.mrb[0].mxu0
    %535 = vdwg.mxu0
    %v536 = vadd.f32 %v417, %v518
    %v537 = vadd.f32 %v422, %v523
    %v538 = vadd.f32 %v427, %v528
    %v539 = vadd.f32 %v432, %v533
    %v540 = vlaneseq
    %v541 = vshrl.u32 %v540, 7
    %v542 = vsub.s32 0, %v541
    %v543 = vrot.slane %v32, %v542
    %v544 = vadd.f32 %v536, %v543
    %v545 = vadd.f32 %v537, %v543
    %v546 = vadd.f32 %v538, %v543
    %v547 = vadd.f32 %v539, %v543
    %v548 = vmax.f32 %v544, 0.0
    %v549 = vmax.f32 %v545, 0.0
    %v550 = vmax.f32 %v546, 0.0
    %v551 = vmax.f32 %v547, 0.0
    %v552 = vrot.slane %v548, 7
    %v553 = vrot.slane %v549, 7
    %v554 = vrot.slane %v550, 7
    %v555 = vrot.slane %v551, 7
    %v556 = vsel %vm210, %v554, %v555
    %v557 = vsel %vm210, %v553, %v554
    %v558 = vsel %vm210, %v552, %v553
    %v559 = vsel %vm210, %v555, %v552
    %v560 = vmul.f32 %v559, %v40
    %v561 = vmul.f32 %v558, %v45
    %v562 = vmul.f32 %v557, %v50
    %v563 = vmul.f32 %v556, %v55
    %v564 = vrot.slane %v548, 1
    %v565 = vrot.slane %v549, 1
    %v566 = vrot.slane %v550, 1
    %v567 = vrot.slane %v551, 1
    %v568 = vsel %vm223, %v566, %v567
    %v569 = vsel %vm223, %v565, %v566
    %v570 = vsel %vm223, %v564, %v565
    %v571 = vsel %vm223, %v567, %v564
    %v572 = vmul.f32 %v570, %v59
    %v573 = vmul.f32 %v569, %v63
    %v574 = vmul.f32 %v568, %v67
    %v575 = vmul.f32 %v571, %v71
    %v576 = vld [vmem:[#allocation2 + $0xe0] sm:$0xff]
    %v577 = vld [vmem:[#allocation2 + $0xe8] sm:$0xff]
    %v578 = vld [vmem:[#allocation2 + $0xf0] sm:$0xff]
    %v579 = vld [vmem:[#allocation2 + $0xf8] sm:$0xff]
    %v580 = vld [vmem:[#allocation2 + $0x100] sm:$0xff]
    %v581 = vld [vmem:[#allocation2 + $0x108] sm:$0xff]
    %v582 = vld [vmem:[#allocation2 + $0x110] sm:$0xff]
    %v583 = vld [vmem:[#allocation2 + $0x118] sm:$0xff]
    %v585 = vsel %vm240, %v548, 0
    %v588 = vsel %vm240, %v549, 0
    %v591 = vsel %vm240, %v550, 0
    %v594 = vsel %vm240, %v551, 0
    %596 = vmatprep.subr.mxu0 0.0
    %597 = vmatpush1.msra.mxu0 %v580
    %598 = vmatprep.subr.mxu0 0.0
    %599 = vmatpush1.msra.mxu0 %v581
    %600 = vmatprep.subr.mxu0 0.0
    %601 = vmatpush1.msra.mxu0 %v582
    %602 = vmatprep.subr.mxu0 0.0
    %603 = vmatpush1.msra.mxu0 %v583
    %604 = vmatprep.subr.mxu0 0.0
    %605 = vmatpush1.msra.mxu0 0.0
    %606 = vmatprep.subr.mxu0 0.0
    %607 = vmatpush1.msra.mxu0 0.0
    %608 = vmatprep.subr.mxu0 0.0
    %609 = vmatpush1.msra.mxu0 0.0
    %610 = vmatprep.subr.mxu0 0.0
    %611 = vmatpush1.msra.mxu0 0.0
    %612 = vmatprep.subr.mxu0 0.0
    %613 = vmatpush1.msra.mxu0 0.0
    %614 = vmatprep.subr.mxu0 0.0
    %615 = vmatpush1.msra.mxu0 0.0
    %616 = vmatprep.subr.mxu0 0.0
    %617 = vmatpush1.msra.mxu0 0.0
    %618 = vmatprep.subr.mxu0 0.0
    %619 = vmatpush1.msra.mxu0 0.0
    %620 = vmatprep.subr.mxu0 0.0
    %621 = vmatpush1.msra.mxu0 0.0
    %622 = vmatprep.subr.mxu0 0.0
    %623 = vmatpush1.msra.mxu0 0.0
    %624 = vmatprep.subr.mxu0 0.0
    %625 = vmatpush1.msra.mxu0 0.0
    %626 = vmatprep.subr.mxu0 0.0
    %627 = vmatpush1.msra.mxu0 0.0
    %628 = vmatprep.subr.mxu0 0.0
    %629 = vmatpush1.msra.mxu0 0.0
    %630 = vmatprep.subr.mxu0 0.0
    %631 = vmatpush1.msra.mxu0 0.0
    %632 = vmatprep.subr.mxu0 0.0
    %633 = vmatpush1.msra.mxu0 0.0
    %634 = vmatprep.subr.mxu0 0.0
    %635 = vmatpush1.msra.mxu0 0.0
    %636 = vmatprep.subr.mxu0 0.0
    %637 = vmatpush1.msra.mxu0 0.0
    %638 = vmatprep.subr.mxu0 0.0
    %639 = vmatpush1.msra.mxu0 0.0
    %640 = vmatprep.subr.mxu0 0.0
    %641 = vmatpush1.msra.mxu0 0.0
    %642 = vmatprep.subr.mxu0 0.0
    %643 = vmatpush1.msra.mxu0 0.0
    %644 = vmatprep.subr.mxu0 0.0
    %645 = vmatpush1.msra.mxu0 0.0
    %646 = vmatprep.subr.mxu0 0.0
    %647 = vmatpush1.msra.mxu0 0.0
    %648 = vmatprep.subr.mxu0 0.0
    %649 = vmatpush1.msra.mxu0 0.0
    %650 = vmatprep.subr.mxu0 0.0
    %651 = vmatpush1.msra.mxu0 0.0
    %652 = vmatprep.subr.mxu0 0.0
    %653 = vmatpush1.msra.mxu0 0.0
    %654 = vmatprep.subr.mxu0 0.0
    %655 = vmatpush1.msra.mxu0 0.0
    %656 = vmatprep.subr.mxu0 0.0
    %657 = vmatpush1.msra.mxu0 0.0
    %658 = vmatprep.subr.mxu0 0.0
    %659 = vmatpush1.msra.mxu0 0.0
    %660 = vmatprep.mubr.f32.mxu0 0.0
    %661 = vmatmul.mubr.f32.gmra.mrb[0].mxu0 %v585
    %v662 = vpop.f32.mrb[0].mxu0
    %v663 = vadd.f32 0.0, %v662
    %v664 = vpop.f32.mrb[0].mxu0
    %665 = vmatprep.mubr.f32.mxu0 0.0
    %666 = vmatmul.mubr.f32.gmra.mrb[0].mxu0 %v588
    %v667 = vpop.f32.mrb[0].mxu0
    %v668 = vadd.f32 0.0, %v667
    %v669 = vpop.f32.mrb[0].mxu0
    %670 = vmatprep.mubr.f32.mxu0 0.0
    %671 = vmatmul.mubr.f32.gmra.mrb[0].mxu0 %v591
    %v672 = vpop.f32.mrb[0].mxu0
    %v673 = vadd.f32 0.0, %v672
    %v674 = vpop.f32.mrb[0].mxu0
    %675 = vmatprep.mubr.f32.mxu0 0.0
    %676 = vmatmul.mubr.f32.gmra.mrb[0].mxu0 %v594
    %v677 = vpop.f32.mrb[0].mxu0
    %v678 = vadd.f32 0.0, %v677
    %v679 = vpop.f32.mrb[0].mxu0
    %680 = vdwg.mxu0
    %v682 = vsel %vm240, %v560, 0
    %v685 = vsel %vm240, %v561, 0
    %v688 = vsel %vm240, %v562, 0
    %v691 = vsel %vm240, %v563, 0
    %693 = vmatprep.subr.mxu0 0.0
    %694 = vmatpush1.msra.mxu0 %v576
    %695 = vmatprep.subr.mxu0 0.0
    %696 = vmatpush1.msra.mxu0 %v577
    %697 = vmatprep.subr.mxu0 0.0
    %698 = vmatpush1.msra.mxu0 %v578
    %699 = vmatprep.subr.mxu0 0.0
    %700 = vmatpush1.msra.mxu0 %v579
    %701 = vmatprep.subr.mxu0 0.0
    %702 = vmatpush1.msra.mxu0 0.0
    %703 = vmatprep.subr.mxu0 0.0
    %704 = vmatpush1.msra.mxu0 0.0
    %705 = vmatprep.subr.mxu0 0.0
    %706 = vmatpush1.msra.mxu0 0.0
    %707 = vmatprep.subr.mxu0 0.0
    %708 = vmatpush1.msra.mxu0 0.0
    %709 = vmatprep.subr.mxu0 0.0
    %710 = vmatpush1.msra.mxu0 0.0
    %711 = vmatprep.subr.mxu0 0.0
    %712 = vmatpush1.msra.mxu0 0.0
    %713 = vmatprep.subr.mxu0 0.0
    %714 = vmatpush1.msra.mxu0 0.0
    %715 = vmatprep.subr.mxu0 0.0
    %716 = vmatpush1.msra.mxu0 0.0
    %717 = vmatprep.subr.mxu0 0.0
    %718 = vmatpush1.msra.mxu0 0.0
    %719 = vmatprep.subr.mxu0 0.0
    %720 = vmatpush1.msra.mxu0 0.0
    %721 = vmatprep.subr.mxu0 0.0
    %722 = vmatpush1.msra.mxu0 0.0
    %723 = vmatprep.subr.mxu0 0.0
    %724 = vmatpush1.msra.mxu0 0.0
    %725 = vmatprep.subr.mxu0 0.0
    %726 = vmatpush1.msra.mxu0 0.0
    %727 = vmatprep.subr.mxu0 0.0
    %728 = vmatpush1.msra.mxu0 0.0
    %729 = vmatprep.subr.mxu0 0.0
    %730 = vmatpush1.msra.mxu0 0.0
    %731 = vmatprep.subr.mxu0 0.0
    %732 = vmatpush1.msra.mxu0 0.0
    %733 = vmatprep.subr.mxu0 0.0
    %734 = vmatpush1.msra.mxu0 0.0
    %735 = vmatprep.subr.mxu0 0.0
    %736 = vmatpush1.msra.mxu0 0.0
    %737 = vmatprep.subr.mxu0 0.0
    %738 = vmatpush1.msra.mxu0 0.0
    %739 = vmatprep.subr.mxu0 0.0
    %740 = vmatpush1.msra.mxu0 0.0
    %741 = vmatprep.subr.mxu0 0.0
    %742 = vmatpush1.msra.mxu0 0.0
    %743 = vmatprep.subr.mxu0 0.0
    %744 = vmatpush1.msra.mxu0 0.0
    %745 = vmatprep.subr.mxu0 0.0
    %746 = vmatpush1.msra.mxu0 0.0
    %747 = vmatprep.subr.mxu0 0.0
    %748 = vmatpush1.msra.mxu0 0.0
    %749 = vmatprep.subr.mxu0 0.0
    %750 = vmatpush1.msra.mxu0 0.0
    %751 = vmatprep.subr.mxu0 0.0
    %752 = vmatpush1.msra.mxu0 0.0
    %753 = vmatprep.subr.mxu0 0.0
    %754 = vmatpush1.msra.mxu0 0.0
    %755 = vmatprep.subr.mxu0 0.0
    %756 = vmatpush1.msra.mxu0 0.0
    %757 = vmatprep.mubr.f32.mxu0 0.0
    %758 = vmatmul.mubr.f32.gmra.mrb[0].mxu0 %v682
    %v759 = vpop.f32.mrb[0].mxu0
    %v760 = vadd.f32 %v663, %v759
    %v761 = vpop.f32.mrb[0].mxu0
    %762 = vmatprep.mubr.f32.mxu0 0.0
    %763 = vmatmul.mubr.f32.gmra.mrb[0].mxu0 %v685
    %v764 = vpop.f32.mrb[0].mxu0
    %v765 = vadd.f32 %v668, %v764
    %v766 = vpop.f32.mrb[0].mxu0
    %767 = vmatprep.mubr.f32.mxu0 0.0
    %768 = vmatmul.mubr.f32.gmra.mrb[0].mxu0 %v688
    %v769 = vpop.f32.mrb[0].mxu0
    %v770 = vadd.f32 %v673, %v769
    %v771 = vpop.f32.mrb[0].mxu0
    %772 = vmatprep.mubr.f32.mxu0 0.0
    %773 = vmatmul.mubr.f32.gmra.mrb[0].mxu0 %v691
    %v774 = vpop.f32.mrb[0].mxu0
    %v775 = vadd.f32 %v678, %v774
    %v776 = vpop.f32.mrb[0].mxu0
    %777 = vdwg.mxu0
    %v778 = vld [vmem:[#allocation2 + $0x120] sm:$0xff]
    %v779 = vld [vmem:[#allocation2 + $0x128] sm:$0xff]
    %v780 = vld [vmem:[#allocation2 + $0x130] sm:$0xff]
    %v781 = vld [vmem:[#allocation2 + $0x138] sm:$0xff]
    %v783 = vsel %vm240, %v572, 0
    %v786 = vsel %vm240, %v573, 0
    %v789 = vsel %vm240, %v574, 0
    %v792 = vsel %vm240, %v575, 0
    %794 = vmatprep.subr.mxu0 0.0
    %795 = vmatpush1.msra.mxu0 %v778
    %796 = vmatprep.subr.mxu0 0.0
    %797 = vmatpush1.msra.mxu0 %v779
    %798 = vmatprep.subr.mxu0 0.0
    %799 = vmatpush1.msra.mxu0 %v780
    %800 = vmatprep.subr.mxu0 0.0
    %801 = vmatpush1.msra.mxu0 %v781
    %802 = vmatprep.subr.mxu0 0.0
    %803 = vmatpush1.msra.mxu0 0.0
    %804 = vmatprep.subr.mxu0 0.0
    %805 = vmatpush1.msra.mxu0 0.0
    %806 = vmatprep.subr.mxu0 0.0
    %807 = vmatpush1.msra.mxu0 0.0
    %808 = vmatprep.subr.mxu0 0.0
    %809 = vmatpush1.msra.mxu0 0.0
    %810 = vmatprep.subr.mxu0 0.0
    %811 = vmatpush1.msra.mxu0 0.0
    %812 = vmatprep.subr.mxu0 0.0
    %813 = vmatpush1.msra.mxu0 0.0
    %814 = vmatprep.subr.mxu0 0.0
    %815 = vmatpush1.msra.mxu0 0.0
    %816 = vmatprep.subr.mxu0 0.0
    %817 = vmatpush1.msra.mxu0 0.0
    %818 = vmatprep.subr.mxu0 0.0
    %819 = vmatpush1.msra.mxu0 0.0
    %820 = vmatprep.subr.mxu0 0.0
    %821 = vmatpush1.msra.mxu0 0.0
    %822 = vmatprep.subr.mxu0 0.0
    %823 = vmatpush1.msra.mxu0 0.0
    %824 = vmatprep.subr.mxu0 0.0
    %825 = vmatpush1.msra.mxu0 0.0
    %826 = vmatprep.subr.mxu0 0.0
    %827 = vmatpush1.msra.mxu0 0.0
    %828 = vmatprep.subr.mxu0 0.0
    %829 = vmatpush1.msra.mxu0 0.0
    %830 = vmatprep.subr.mxu0 0.0
    %831 = vmatpush1.msra.mxu0 0.0
    %832 = vmatprep.subr.mxu0 0.0
    %833 = vmatpush1.msra.mxu0 0.0
    %834 = vmatprep.subr.mxu0 0.0
    %835 = vmatpush1.msra.mxu0 0.0
    %836 = vmatprep.subr.mxu0 0.0
    %837 = vmatpush1.msra.mxu0 0.0
    %838 = vmatprep.subr.mxu0 0.0
    %839 = vmatpush1.msra.mxu0 0.0
    %840 = vmatprep.subr.mxu0 0.0
    %841 = vmatpush1.msra.mxu0 0.0
    %842 = vmatprep.subr.mxu0 0.0
    %843 = vmatpush1.msra.mxu0 0.0
    %844 = vmatprep.subr.mxu0 0.0
    %845 = vmatpush1.msra.mxu0 0.0
    %846 = vmatprep.subr.mxu0 0.0
    %847 = vmatpush1.msra.mxu0 0.0
    %848 = vmatprep.subr.mxu0 0.0
    %849 = vmatpush1.msra.mxu0 0.0
    %850 = vmatprep.subr.mxu0 0.0
    %851 = vmatpush1.msra.mxu0 0.0
    %852 = vmatprep.subr.mxu0 0.0
    %853 = vmatpush1.msra.mxu0 0.0
    %854 = vmatprep.subr.mxu0 0.0
    %855 = vmatpush1.msra.mxu0 0.0
    %856 = vmatprep.subr.mxu0 0.0
    %857 = vmatpush1.msra.mxu0 0.0
    %858 = vmatprep.mubr.f32.mxu0 0.0
    %859 = vmatmul.mubr.f32.gmra.mrb[0].mxu0 %v783
    %v860 = vpop.f32.mrb[0].mxu0
    %v861 = vadd.f32 0.0, %v860
    %v862 = vpop.f32.mrb[0].mxu0
    %863 = vmatprep.mubr.f32.mxu0 0.0
    %864 = vmatmul.mubr.f32.gmra.mrb[0].mxu0 %v786
    %v865 = vpop.f32.mrb[0].mxu0
    %v866 = vadd.f32 0.0, %v865
    %v867 = vpop.f32.mrb[0].mxu0
    %868 = vmatprep.mubr.f32.mxu0 0.0
    %869 = vmatmul.mubr.f32.gmra.mrb[0].mxu0 %v789
    %v870 = vpop.f32.mrb[0].mxu0
    %v871 = vadd.f32 0.0, %v870
    %v872 = vpop.f32.mrb[0].mxu0
    %873 = vmatprep.mubr.f32.mxu0 0.0
    %874 = vmatmul.mubr.f32.gmra.mrb[0].mxu0 %v792
    %v875 = vpop.f32.mrb[0].mxu0
    %v876 = vadd.f32 0.0, %v875
    %v877 = vpop.f32.mrb[0].mxu0
    %878 = vdwg.mxu0
    %v879 = vadd.f32 %v760, %v861
    %v880 = vadd.f32 %v765, %v866
    %v881 = vadd.f32 %v770, %v871
    %v882 = vadd.f32 %v775, %v876
    %v883 = vlaneseq
    %v884 = vshrl.u32 %v883, 7
    %v885 = vsub.s32 1, %v884
    %v886 = vrot.slane %v32, %v885
    %v887 = vadd.f32 %v879, %v886
    %v888 = vadd.f32 %v880, %v886
    %v889 = vadd.f32 %v881, %v886
    %v890 = vadd.f32 %v882, %v886
    %v891 = vmax.f32 %v887, 0.0
    %v892 = vmax.f32 %v888, 0.0
    %v893 = vmax.f32 %v889, 0.0
    %v894 = vmax.f32 %v890, 0.0
    %v895 = vrot.slane %v891, 7
    %v896 = vrot.slane %v892, 7
    %v897 = vrot.slane %v893, 7
    %v898 = vrot.slane %v894, 7
    %v899 = vsel %vm210, %v897, %v898
    %v900 = vsel %vm210, %v896, %v897
    %v901 = vsel %vm210, %v895, %v896
    %v902 = vsel %vm210, %v898, %v895
    %v903 = vmul.f32 %v902, %v40
    %v904 = vmul.f32 %v901, %v45
    %v905 = vmul.f32 %v900, %v50
    %v906 = vmul.f32 %v899, %v55
    %v907 = vrot.slane %v891, 1
    %v908 = vrot.slane %v892, 1
    %v909 = vrot.slane %v893, 1
    %v910 = vrot.slane %v894, 1
    %v911 = vsel %vm223, %v909, %v910
    %v912 = vsel %vm223, %v908, %v909
    %v913 = vsel %vm223, %v907, %v908
    %v914 = vsel %vm223, %v910, %v907
    %v915 = vmul.f32 %v913, %v59
    %v916 = vmul.f32 %v912, %v63
    %v917 = vmul.f32 %v911, %v67
    %v918 = vmul.f32 %v914, %v71
    %v919 = vld [vmem:[#allocation2 + $0x140] sm:$0xff]
    %v920 = vld [vmem:[#allocation2 + $0x148] sm:$0xff]
    %v921 = vld [vmem:[#allocation2 + $0x150] sm:$0xff]
    %v922 = vld [vmem:[#allocation2 + $0x158] sm:$0xff]
    %v923 = vld [vmem:[#allocation2 + $0x160] sm:$0xff]
    %v924 = vld [vmem:[#allocation2 + $0x168] sm:$0xff]
    %v925 = vld [vmem:[#allocation2 + $0x170] sm:$0xff]
    %v926 = vld [vmem:[#allocation2 + $0x178] sm:$0xff]
    %v927 = vld [vmem:[#allocation2 + $0x180] sm:$0xff]
    %v928 = vld [vmem:[#allocation2 + $0x188] sm:$0xff]
    %v929 = vld [vmem:[#allocation2 + $0x190] sm:$0xff]
    %v930 = vld [vmem:[#allocation2 + $0x198] sm:$0xff]
    %v931 = vld [vmem:[#allocation2 + $0x1a0] sm:$0xff]
    %v932 = vld [vmem:[#allocation2 + $0x1a8] sm:$0xff]
    %v933 = vld [vmem:[#allocation2 + $0x1b0] sm:$0xff]
    %v934 = vld [vmem:[#allocation2 + $0x1b8] sm:$0xff]
    %vm935 = vcmask 523264
    %v937 = vsel %vm935, %v891, 0
    %v940 = vsel %vm935, %v892, 0
    %v943 = vsel %vm935, %v893, 0
    %v946 = vsel %vm935, %v894, 0
    %948 = vmatprep.subr.mxu0 0.0
    %949 = vmatpush1.msra.mxu0 %v927
    %950 = vmatprep.subr.mxu0 0.0
    %951 = vmatpush1.msra.mxu0 %v928
    %952 = vmatprep.subr.mxu0 0.0
    %953 = vmatpush1.msra.mxu0 %v929
    %954 = vmatprep.subr.mxu0 0.0
    %955 = vmatpush1.msra.mxu0 %v930
    %956 = vmatprep.subr.mxu0 0.0
    %957 = vmatpush1.msra.mxu0 %v931
    %958 = vmatprep.subr.mxu0 0.0
    %959 = vmatpush1.msra.mxu0 %v932
    %960 = vmatprep.subr.mxu0 0.0
    %961 = vmatpush1.msra.mxu0 %v933
    %962 = vmatprep.subr.mxu0 0.0
    %963 = vmatpush1.msra.mxu0 %v934
    %964 = vmatprep.subr.mxu0 0.0
    %965 = vmatpush1.msra.mxu0 0.0
    %966 = vmatprep.subr.mxu0 0.0
    %967 = vmatpush1.msra.mxu0 0.0
    %968 = vmatprep.subr.mxu0 0.0
    %969 = vmatpush1.msra.mxu0 0.0
    %970 = vmatprep.subr.mxu0 0.0
    %971 = vmatpush1.msra.mxu0 0.0
    %972 = vmatprep.subr.mxu0 0.0
    %973 = vmatpush1.msra.mxu0 0.0
    %974 = vmatprep.subr.mxu0 0.0
    %975 = vmatpush1.msra.mxu0 0.0
    %976 = vmatprep.subr.mxu0 0.0
    %977 = vmatpush1.msra.mxu0 0.0
    %978 = vmatprep.subr.mxu0 0.0
    %979 = vmatpush1.msra.mxu0 0.0
    %980 = vmatprep.subr.mxu0 0.0
    %981 = vmatpush1.msra.mxu0 0.0
    %982 = vmatprep.subr.mxu0 0.0
    %983 = vmatpush1.msra.mxu0 0.0
    %984 = vmatprep.subr.mxu0 0.0
    %985 = vmatpush1.msra.mxu0 0.0
    %986 = vmatprep.subr.mxu0 0.0
    %987 = vmatpush1.msra.mxu0 0.0
    %988 = vmatprep.subr.mxu0 0.0
    %989 = vmatpush1.msra.mxu0 0.0
    %990 = vmatprep.subr.mxu0 0.0
    %991 = vmatpush1.msra.mxu0 0.0
    %992 = vmatprep.subr.mxu0 0.0
    %993 = vmatpush1.msra.mxu0 0.0
    %994 = vmatprep.subr.mxu0 0.0
    %995 = vmatpush1.msra.mxu0 0.0
    %996 = vmatprep.subr.mxu0 0.0
    %997 = vmatpush1.msra.mxu0 0.0
    %998 = vmatprep.subr.mxu0 0.0
    %999 = vmatpush1.msra.mxu0 0.0
    %1000 = vmatprep.subr.mxu0 0.0
    %1001 = vmatpush1.msra.mxu0 0.0
    %1002 = vmatprep.subr.mxu0 0.0
    %1003 = vmatpush1.msra.mxu0 0.0
    %1004 = vmatprep.subr.mxu0 0.0
    %1005 = vmatpush1.msra.mxu0 0.0
    %1006 = vmatprep.subr.mxu0 0.0
    %1007 = vmatpush1.msra.mxu0 0.0
    %1008 = vmatprep.subr.mxu0 0.0
    %1009 = vmatpush1.msra.mxu0 0.0
    %1010 = vmatprep.subr.mxu0 0.0
    %1011 = vmatpush1.msra.mxu0 0.0
    %1012 = vmatprep.mubr.f32.mxu0 0.0
    %1013 = vmatmul.mubr.f32.gmra.mrb[0].mxu0 %v937
    %v1014 = vpop.f32.mrb[0].mxu0
    %v1015 = vadd.f32 0.0, %v1014
    %v1016 = vpop.f32.mrb[0].mxu0
    %1017 = vmatprep.mubr.f32.mxu0 0.0
    %1018 = vmatmul.mubr.f32.gmra.mrb[0].mxu0 %v940
    %v1019 = vpop.f32.mrb[0].mxu0
    %v1020 = vadd.f32 0.0, %v1019
    %v1021 = vpop.f32.mrb[0].mxu0
    %1022 = vmatprep.mubr.f32.mxu0 0.0
    %1023 = vmatmul.mubr.f32.gmra.mrb[0].mxu0 %v943
    %v1024 = vpop.f32.mrb[0].mxu0
    %v1025 = vadd.f32 0.0, %v1024
    %v1026 = vpop.f32.mrb[0].mxu0
    %1027 = vmatprep.mubr.f32.mxu0 0.0
    %1028 = vmatmul.mubr.f32.gmra.mrb[0].mxu0 %v946
    %v1029 = vpop.f32.mrb[0].mxu0
    %v1030 = vadd.f32 0.0, %v1029
    %v1031 = vpop.f32.mrb[0].mxu0
    %1032 = vdwg.mxu0
    %v1034 = vsel %vm935, %v903, 0
    %v1037 = vsel %vm935, %v904, 0
    %v1040 = vsel %vm935, %v905, 0
    %v1043 = vsel %vm935, %v906, 0
    %1045 = vmatprep.subr.mxu0 0.0
    %1046 = vmatpush1.msra.mxu0 %v919
    %1047 = vmatprep.subr.mxu0 0.0
    %1048 = vmatpush1.msra.mxu0 %v920
    %1049 = vmatprep.subr.mxu0 0.0
    %1050 = vmatpush1.msra.mxu0 %v921
    %1051 = vmatprep.subr.mxu0 0.0
    %1052 = vmatpush1.msra.mxu0 %v922
    %1053 = vmatprep.subr.mxu0 0.0
    %1054 = vmatpush1.msra.mxu0 %v923
    %1055 = vmatprep.subr.mxu0 0.0
    %1056 = vmatpush1.msra.mxu0 %v924
    %1057 = vmatprep.subr.mxu0 0.0
    %1058 = vmatpush1.msra.mxu0 %v925
    %1059 = vmatprep.subr.mxu0 0.0
    %1060 = vmatpush1.msra.mxu0 %v926
    %1061 = vmatprep.subr.mxu0 0.0
    %1062 = vmatpush1.msra.mxu0 0.0
    %1063 = vmatprep.subr.mxu0 0.0
    %1064 = vmatpush1.msra.mxu0 0.0
    %1065 = vmatprep.subr.mxu0 0.0
    %1066 = vmatpush1.msra.mxu0 0.0
    %1067 = vmatprep.subr.mxu0 0.0
    %1068 = vmatpush1.msra.mxu0 0.0
    %1069 = vmatprep.subr.mxu0 0.0
    %1070 = vmatpush1.msra.mxu0 0.0
    %1071 = vmatprep.subr.mxu0 0.0
    %1072 = vmatpush1.msra.mxu0 0.0
    %1073 = vmatprep.subr.mxu0 0.0
    %1074 = vmatpush1.msra.mxu0 0.0
    %1075 = vmatprep.subr.mxu0 0.0
    %1076 = vmatpush1.msra.mxu0 0.0
    %1077 = vmatprep.subr.mxu0 0.0
    %1078 = vmatpush1.msra.mxu0 0.0
    %1079 = vmatprep.subr.mxu0 0.0
    %1080 = vmatpush1.msra.mxu0 0.0
    %1081 = vmatprep.subr.mxu0 0.0
    %1082 = vmatpush1.msra.mxu0 0.0
    %1083 = vmatprep.subr.mxu0 0.0
    %1084 = vmatpush1.msra.mxu0 0.0
    %1085 = vmatprep.subr.mxu0 0.0
    %1086 = vmatpush1.msra.mxu0 0.0
    %1087 = vmatprep.subr.mxu0 0.0
    %1088 = vmatpush1.msra.mxu0 0.0
    %1089 = vmatprep.subr.mxu0 0.0
    %1090 = vmatpush1.msra.mxu0 0.0
    %1091 = vmatprep.subr.mxu0 0.0
    %1092 = vmatpush1.msra.mxu0 0.0
    %1093 = vmatprep.subr.mxu0 0.0
    %1094 = vmatpush1.msra.mxu0 0.0
    %1095 = vmatprep.subr.mxu0 0.0
    %1096 = vmatpush1.msra.mxu0 0.0
    %1097 = vmatprep.subr.mxu0 0.0
    %1098 = vmatpush1.msra.mxu0 0.0
    %1099 = vmatprep.subr.mxu0 0.0
    %1100 = vmatpush1.msra.mxu0 0.0
    %1101 = vmatprep.subr.mxu0 0.0
    %1102 = vmatpush1.msra.mxu0 0.0
    %1103 = vmatprep.subr.mxu0 0.0
    %1104 = vmatpush1.msra.mxu0 0.0
    %1105 = vmatprep.subr.mxu0 0.0
    %1106 = vmatpush1.msra.mxu0 0.0
    %1107 = vmatprep.subr.mxu0 0.0
    %1108 = vmatpush1.msra.mxu0 0.0
    %1109 = vmatprep.mubr.f32.mxu0 0.0
    %1110 = vmatmul.mubr.f32.gmra.mrb[0].mxu0 %v1034
    %v1111 = vpop.f32.mrb[0].mxu0
    %v1112 = vadd.f32 %v1015, %v1111
    %v1113 = vpop.f32.mrb[0].mxu0
    %1114 = vmatprep.mubr.f32.mxu0 0.0
    %1115 = vmatmul.mubr.f32.gmra.mrb[0].mxu0 %v1037
    %v1116 = vpop.f32.mrb[0].mxu0
    %v1117 = vadd.f32 %v1020, %v1116
    %v1118 = vpop.f32.mrb[0].mxu0
    %1119 = vmatprep.mubr.f32.mxu0 0.0
    %1120 = vmatmul.mubr.f32.gmra.mrb[0].mxu0 %v1040
    %v1121 = vpop.f32.mrb[0].mxu0
    %v1122 = vadd.f32 %v1025, %v1121
    %v1123 = vpop.f32.mrb[0].mxu0
    %1124 = vmatprep.mubr.f32.mxu0 0.0
    %1125 = vmatmul.mubr.f32.gmra.mrb[0].mxu0 %v1043
    %v1126 = vpop.f32.mrb[0].mxu0
    %v1127 = vadd.f32 %v1030, %v1126
    %v1128 = vpop.f32.mrb[0].mxu0
    %1129 = vdwg.mxu0
    %v1130 = vld [vmem:[#allocation2 + $0x1c0] sm:$0xff]
    %v1131 = vld [vmem:[#allocation2 + $0x1c8] sm:$0xff]
    %v1132 = vld [vmem:[#allocation2 + $0x1d0] sm:$0xff]
    %v1133 = vld [vmem:[#allocation2 + $0x1d8] sm:$0xff]
    %v1134 = vld [vmem:[#allocation2 + $0x1e0] sm:$0xff]
    %v1135 = vld [vmem:[#allocation2 + $0x1e8] sm:$0xff]
    %v1136 = vld [vmem:[#allocation2 + $0x1f0] sm:$0xff]
    %v1137 = vld [vmem:[#allocation2 + $0x1f8] sm:$0xff]
    %v1139 = vsel %vm935, %v915, 0
    %v1142 = vsel %vm935, %v916, 0
    %v1145 = vsel %vm935, %v917, 0
    %v1148 = vsel %vm935, %v918, 0
    %1150 = vmatprep.subr.mxu0 0.0
    %1151 = vmatpush1.msra.mxu0 %v1130
    %1152 = vmatprep.subr.mxu0 0.0
    %1153 = vmatpush1.msra.mxu0 %v1131
    %1154 = vmatprep.subr.mxu0 0.0
    %1155 = vmatpush1.msra.mxu0 %v1132
    %1156 = vmatprep.subr.mxu0 0.0
    %1157 = vmatpush1.msra.mxu0 %v1133
    %1158 = vmatprep.subr.mxu0 0.0
    %1159 = vmatpush1.msra.mxu0 %v1134
    %1160 = vmatprep.subr.mxu0 0.0
    %1161 = vmatpush1.msra.mxu0 %v1135
    %1162 = vmatprep.subr.mxu0 0.0
    %1163 = vmatpush1.msra.mxu0 %v1136
    %1164 = vmatprep.subr.mxu0 0.0
    %1165 = vmatpush1.msra.mxu0 %v1137
    %1166 = vmatprep.subr.mxu0 0.0
    %1167 = vmatpush1.msra.mxu0 0.0
    %1168 = vmatprep.subr.mxu0 0.0
    %1169 = vmatpush1.msra.mxu0 0.0
    %1170 = vmatprep.subr.mxu0 0.0
    %1171 = vmatpush1.msra.mxu0 0.0
    %1172 = vmatprep.subr.mxu0 0.0
    %1173 = vmatpush1.msra.mxu0 0.0
    %1174 = vmatprep.subr.mxu0 0.0
    %1175 = vmatpush1.msra.mxu0 0.0
    %1176 = vmatprep.subr.mxu0 0.0
    %1177 = vmatpush1.msra.mxu0 0.0
    %1178 = vmatprep.subr.mxu0 0.0
    %1179 = vmatpush1.msra.mxu0 0.0
    %1180 = vmatprep.subr.mxu0 0.0
    %1181 = vmatpush1.msra.mxu0 0.0
    %1182 = vmatprep.subr.mxu0 0.0
    %1183 = vmatpush1.msra.mxu0 0.0
    %1184 = vmatprep.subr.mxu0 0.0
    %1185 = vmatpush1.msra.mxu0 0.0
    %1186 = vmatprep.subr.mxu0 0.0
    %1187 = vmatpush1.msra.mxu0 0.0
    %1188 = vmatprep.subr.mxu0 0.0
    %1189 = vmatpush1.msra.mxu0 0.0
    %1190 = vmatprep.subr.mxu0 0.0
    %1191 = vmatpush1.msra.mxu0 0.0
    %1192 = vmatprep.subr.mxu0 0.0
    %1193 = vmatpush1.msra.mxu0 0.0
    %1194 = vmatprep.subr.mxu0 0.0
    %1195 = vmatpush1.msra.mxu0 0.0
    %1196 = vmatprep.subr.mxu0 0.0
    %1197 = vmatpush1.msra.mxu0 0.0
    %1198 = vmatprep.subr.mxu0 0.0
    %1199 = vmatpush1.msra.mxu0 0.0
    %1200 = vmatprep.subr.mxu0 0.0
    %1201 = vmatpush1.msra.mxu0 0.0
    %1202 = vmatprep.subr.mxu0 0.0
    %1203 = vmatpush1.msra.mxu0 0.0
    %1204 = vmatprep.subr.mxu0 0.0
    %1205 = vmatpush1.msra.mxu0 0.0
    %1206 = vmatprep.subr.mxu0 0.0
    %1207 = vmatpush1.msra.mxu0 0.0
    %1208 = vmatprep.subr.mxu0 0.0
    %1209 = vmatpush1.msra.mxu0 0.0
    %1210 = vmatprep.subr.mxu0 0.0
    %1211 = vmatpush1.msra.mxu0 0.0
    %1212 = vmatprep.subr.mxu0 0.0
    %1213 = vmatpush1.msra.mxu0 0.0
    %1214 = vmatprep.mubr.f32.mxu0 0.0
    %1215 = vmatmul.mubr.f32.gmra.mrb[0].mxu0 %v1139
    %v1216 = vpop.f32.mrb[0].mxu0
    %v1217 = vadd.f32 0.0, %v1216
    %v1218 = vpop.f32.mrb[0].mxu0
    %1219 = vmatprep.mubr.f32.mxu0 0.0
    %1220 = vmatmul.mubr.f32.gmra.mrb[0].mxu0 %v1142
    %v1221 = vpop.f32.mrb[0].mxu0
    %v1222 = vadd.f32 0.0, %v1221
    %v1223 = vpop.f32.mrb[0].mxu0
    %1224 = vmatprep.mubr.f32.mxu0 0.0
    %1225 = vmatmul.mubr.f32.gmra.mrb[0].mxu0 %v1145
    %v1226 = vpop.f32.mrb[0].mxu0
    %v1227 = vadd.f32 0.0, %v1226
    %v1228 = vpop.f32.mrb[0].mxu0
    %1229 = vmatprep.mubr.f32.mxu0 0.0
    %1230 = vmatmul.mubr.f32.gmra.mrb[0].mxu0 %v1148
    %v1231 = vpop.f32.mrb[0].mxu0
    %v1232 = vadd.f32 0.0, %v1231
    %v1233 = vpop.f32.mrb[0].mxu0
    %1234 = vdwg.mxu0
    %v1235 = vadd.f32 %v1112, %v1217
    %v1236 = vadd.f32 %v1117, %v1222
    %v1237 = vadd.f32 %v1122, %v1227
    %v1238 = vadd.f32 %v1127, %v1232
    %v1239 = vlaneseq
    %v1240 = vshrl.u32 %v1239, 7
    %v1241 = vsub.s32 2, %v1240
    %v1242 = vrot.slane %v32, %v1241
    %v1243 = vadd.f32 %v1235, %v1242
    %v1244 = vadd.f32 %v1236, %v1242
    %v1245 = vadd.f32 %v1237, %v1242
    %v1246 = vadd.f32 %v1238, %v1242
    %v1247 = vmax.f32 %v1243, 0.0
    %v1248 = vmax.f32 %v1244, 0.0
    %v1249 = vmax.f32 %v1245, 0.0
    %v1250 = vmax.f32 %v1246, 0.0
    %v1251 = vsel %vm240, %v1247, -inf
    %v1252 = vsel %vm240, %v1248, -inf
    %v1253 = vmax.f32 %v1251, %v1252
    %v1254 = vrot.slane %v1253, 4
    %v1255 = vmax.f32 %v1253, %v1254
    %v1256 = vrot.slane %v1255, 2
    %v1257 = vmax.f32 %v1255, %v1256
    %v1258 = vrot.slane %v1257, 1
    %v1259 = vmax.f32 %v1257, %v1258
    %v1260 = vsel %vm240, %v1249, -inf
    %v1261 = vsel %vm240, %v1250, -inf
    %v1262 = vmax.f32 %v1260, %v1261
    %v1263 = vrot.slane %v1262, 4
    %v1264 = vmax.f32 %v1262, %v1263
    %v1265 = vrot.slane %v1264, 2
    %v1266 = vmax.f32 %v1264, %v1265
    %v1267 = vrot.slane %v1266, 1
    %v1268 = vmax.f32 %v1266, %v1267
    %vm1271 = vcmask 1041409
    %v1272 = vsel %vm1271, %v1268, %v1259
    %vm1274 = vcmask 1041408
    %v1275 = vsel %vm1274, %v1272, 0.0
    %v1276 = vld [vmem:[#allocation2 + $0x200] sm:$0xff]
    %v1277 = vld [vmem:[#allocation2 + $0x208] sm:$0xff]
    %v1278 = vld [vmem:[#allocation2 + $0x210] sm:$0xff]
    %v1279 = vld [vmem:[#allocation2 + $0x218] sm:$0xff]
    %v1280 = vlaneseq
    %v1281 = vshrl.u32 %v1280, 7
    %v1282 = vsub.s32 3, %v1281
    %v1283 = vrot.slane %v32, %v1282
    %v1285 = vsel %vm240, %v1275, 0
    %v1288 = vsel %vm240, %v1247, 0
    %v1291 = vsel %vm240, %v1248, 0
    %v1294 = vsel %vm240, %v1249, 0
    %v1297 = vsel %vm240, %v1250, 0
    %1299 = vmatprep.subr.mxu0 0.0
    %1300 = vmatpush1.msra.mxu0 %v1276
    %1301 = vmatprep.subr.mxu0 0.0
    %1302 = vmatpush1.msra.mxu0 %v1277
    %1303 = vmatprep.subr.mxu0 0.0
    %1304 = vmatpush1.msra.mxu0 %v1278
    %1305 = vmatprep.subr.mxu0 0.0
    %1306 = vmatpush1.msra.mxu0 %v1279
    %1307 = vmatprep.subr.mxu0 0.0
    %1308 = vmatpush1.msra.mxu0 0.0
    %1309 = vmatprep.subr.mxu0 0.0
    %1310 = vmatpush1.msra.mxu0 0.0
    %1311 = vmatprep.subr.mxu0 0.0
    %1312 = vmatpush1.msra.mxu0 0.0
    %1313 = vmatprep.subr.mxu0 0.0
    %1314 = vmatpush1.msra.mxu0 0.0
    %1315 = vmatprep.subr.mxu0 0.0
    %1316 = vmatpush1.msra.mxu0 0.0
    %1317 = vmatprep.subr.mxu0 0.0
    %1318 = vmatpush1.msra.mxu0 0.0
    %1319 = vmatprep.subr.mxu0 0.0
    %1320 = vmatpush1.msra.mxu0 0.0
    %1321 = vmatprep.subr.mxu0 0.0
    %1322 = vmatpush1.msra.mxu0 0.0
    %1323 = vmatprep.subr.mxu0 0.0
    %1324 = vmatpush1.msra.mxu0 0.0
    %1325 = vmatprep.subr.mxu0 0.0
    %1326 = vmatpush1.msra.mxu0 0.0
    %1327 = vmatprep.subr.mxu0 0.0
    %1328 = vmatpush1.msra.mxu0 0.0
    %1329 = vmatprep.subr.mxu0 0.0
    %1330 = vmatpush1.msra.mxu0 0.0
    %1331 = vmatprep.subr.mxu0 0.0
    %1332 = vmatpush1.msra.mxu0 0.0
    %1333 = vmatprep.subr.mxu0 0.0
    %1334 = vmatpush1.msra.mxu0 0.0
    %1335 = vmatprep.subr.mxu0 0.0
    %1336 = vmatpush1.msra.mxu0 0.0
    %1337 = vmatprep.subr.mxu0 0.0
    %1338 = vmatpush1.msra.mxu0 0.0
    %1339 = vmatprep.subr.mxu0 0.0
    %1340 = vmatpush1.msra.mxu0 0.0
    %1341 = vmatprep.subr.mxu0 0.0
    %1342 = vmatpush1.msra.mxu0 0.0
    %1343 = vmatprep.subr.mxu0 0.0
    %1344 = vmatpush1.msra.mxu0 0.0
    %1345 = vmatprep.subr.mxu0 0.0
    %1346 = vmatpush1.msra.mxu0 0.0
    %1347 = vmatprep.subr.mxu0 0.0
    %1348 = vmatpush1.msra.mxu0 0.0
    %1349 = vmatprep.subr.mxu0 0.0
    %1350 = vmatpush1.msra.mxu0 0.0
    %1351 = vmatprep.subr.mxu0 0.0
    %1352 = vmatpush1.msra.mxu0 0.0
    %1353 = vmatprep.subr.mxu0 0.0
    %1354 = vmatpush1.msra.mxu0 0.0
    %1355 = vmatprep.subr.mxu0 0.0
    %1356 = vmatpush1.msra.mxu0 0.0
    %1357 = vmatprep.subr.mxu0 0.0
    %1358 = vmatpush1.msra.mxu0 0.0
    %1359 = vmatprep.subr.mxu0 0.0
    %1360 = vmatpush1.msra.mxu0 0.0
    %1361 = vmatprep.subr.mxu0 0.0
    %1362 = vmatpush1.msra.mxu0 0.0
    %1363 = vmatprep.mubr.f32.mxu0 0.0
    %1364 = vmatmul.mubr.f32.gmra.mrb[0].mxu0 %v1285
    %v1365 = vpop.f32.mrb[0].mxu0
    %v1366 = vadd.f32 %v1283, %v1365
    %v1367 = vpop.f32.mrb[0].mxu0
    %1368 = vmatprep.mubr.f32.mxu0 0.0
    %1369 = vmatmul.mubr.f32.gmra.mrb[0].mxu0 %v1288
    %v1370 = vpop.f32.mrb[0].mxu0
    %v1371 = vadd.f32 %v1283, %v1370
    %v1372 = vpop.f32.mrb[0].mxu0
    %1373 = vmatprep.mubr.f32.mxu0 0.0
    %1374 = vmatmul.mubr.f32.gmra.mrb[0].mxu0 %v1291
    %v1375 = vpop.f32.mrb[0].mxu0
    %v1376 = vadd.f32 %v1283, %v1375
    %v1377 = vpop.f32.mrb[0].mxu0
    %1378 = vmatprep.mubr.f32.mxu0 0.0
    %1379 = vmatmul.mubr.f32.gmra.mrb[0].mxu0 %v1294
    %v1380 = vpop.f32.mrb[0].mxu0
    %v1381 = vadd.f32 %v1283, %v1380
    %v1382 = vpop.f32.mrb[0].mxu0
    %1383 = vmatprep.mubr.f32.mxu0 0.0
    %1384 = vmatmul.mubr.f32.gmra.mrb[0].mxu0 %v1297
    %v1385 = vpop.f32.mrb[0].mxu0
    %v1386 = vadd.f32 %v1283, %v1385
    %v1387 = vpop.f32.mrb[0].mxu0
    %1388 = vdwg.mxu0
    %1389 = vst [vmem:[#allocation5] sm:$0xff] %v1366
    %1390 = vst [vmem:[#allocation5 + $0x8] sm:$0xff] %v1371
    %1391 = vst [vmem:[#allocation5 + $0x10] sm:$0xff] %v1376
    %1392 = vst [vmem:[#allocation5 + $0x18] sm:$0xff] %v1381
    %1393 = vst [vmem:[#allocation5 + $0x20] sm:$0xff] %v1386
    // Predicated region
    $region22: #{tpu_custom_call.1} parent=1 // pred_check
      _
    $region23: #{tpu_custom_call.1} parent=1 // pred_check_branch
      %1395 = sbr.rel (0) target = $region25
    $region24: #{tpu_custom_call.1} parent=1 // pred_region
      %s1397 = ssub.s32 640, 640
      %1398 = vsyncadd [#allocation4], %s1397
      %s1399 = sshll.u32 [#allocation5], 4
      %s1400 = int_to_ptr.vmem [resolvable:$true] %s1399
      %1405 = dma.vmem_to_hbm [thread:$0]  %s1400, 640, %s4, [#allocation4], 128, 128, 8
    $region25: #{tpu_custom_call.1} parent=1 // pred_fallthru
      _
    // Predicated region
    $region26: #{tpu_custom_call.1} parent=1 // pred_check
      _
    $region27: #{tpu_custom_call.1} parent=1 // pred_check_branch
      %1407 = sbr.rel (0) target = $region29
    $region28: #{tpu_custom_call.1} parent=1 // pred_region
      %1408 = dma.done [#allocation4], 640
    $region29: #{tpu_custom_call.1} parent=1 // pred_fallthru
      _
    %1409 = vsyncpa [#allocation3], 1
    %1410 = vsyncpa [#allocation4], 1

</llo_original>
